<compile_context>
chip_gen: v7x
topology: tpu7x:2x2x1
jax: 0.10.0
libtpu: 0.0.40
codegen_flags: <defaults>
</compile_context>

<pallas_src>
import math

import jax
import jax.numpy as jnp
from jax import lax
from jax.experimental import pallas as pl
from jax.experimental.pallas import tpu as pltpu


LAST = 7            # the model consumes the last 7 steps of every indicator
BOLL_WINDOW = 14    # bollinger / RSI window
VOL_PERIOD = 5      # volume-change period


# ------------------------------- fused kernel ----------------------------------

def _fused_forward_kernel(close_ref, high_ref, low_ref, vol_ref, ce_ref,
                          bw1_ref, bb1_ref, bw2_ref, bb2_ref, bw3_ref, bb3_ref,
                          qw1_ref, qb1_ref, qw2_ref, qb2_ref, qw3_ref, qb3_ref,
                          logits_ref, alpha_ref, o_ref):
    f32 = jnp.float32
    N, L = close_ref.shape                 # N = B*C rows, L = lookback (lane dim)
    C = ce_ref.shape[0]
    B = N // C
    O = bb3_ref.shape[1] // 4              # num quantiles
    P = qb3_ref.shape[1]                   # horizon * num_outputs
    HZ = P // O

    close = close_ref[...]
    high = high_ref[...]
    low = low_ref[...]
    vol = vol_ref[...]

    # ---- rolling-window 0/1 matrices (L, LAST); applied with tiny MXU matmuls ----
    def window_matrix(window):
        s = lax.broadcasted_iota(jnp.int32, (L, LAST), 0)
        t = lax.broadcasted_iota(jnp.int32, (L, LAST), 1) + (L - LAST)
        mask_t = ((s <= t) & (s > t - window)).astype(f32)            # (L, LAST)
        cnt = jnp.minimum(t[:1, :] + 1, window).astype(f32)           # (1, LAST)
        return mask_t, cnt

    mask14, cnt14 = window_matrix(BOLL_WINDOW)
    inv14 = 1.0 / cnt14
    tri, _ = window_matrix(L)               # causal prefix-sum matrix (OBV cumsum)

    # ---- price anchors: [mean(close), close[-1], max(high), min(low)] ----
    close_mean = jnp.mean(close, axis=1, keepdims=True)               # (N, 1)
    recent = close[:, L - 1:L]
    hi = jnp.max(high, axis=1, keepdims=True)
    lo = jnp.min(low, axis=1, keepdims=True)

    # ---- bollinger bands on close: shifted-mean variance (numerically safe) ----
    xc = close - close_mean
    m1 = jnp.dot(xc, mask14, preferred_element_type=f32) * inv14      # (N, LAST)
    m2 = jnp.dot(xc * xc, mask14, preferred_element_type=f32) * inv14
    sma7 = m1 + close_mean
    std7 = jnp.sqrt(jnp.maximum(m2 - m1 * m1, 0.0))

    # ---- OBV / RSI / volume change (only the last 7 columns are ever used) ----
    prev = jnp.concatenate([close[:, :1], close[:, :-1]], axis=1)
    diff = close - prev
    sgn = jnp.where(diff > 0.0, 1.0, 0.0) - jnp.where(diff < 0.0, 1.0, 0.0)
    obv7 = jnp.dot(sgn * vol, tri, preferred_element_type=f32)
    gain7 = jnp.dot(jnp.maximum(diff, 0.0), mask14, preferred_element_type=f32) * inv14
    loss7 = jnp.dot(jnp.maximum(-diff, 0.0), mask14, preferred_element_type=f32) * inv14
    rsi7 = 100.0 * gain7 / (gain7 + loss7 + 1e-8)                     # == 100 - 100/(1+rs)
    v_now = vol[:, L - LAST:]
    v_prev = vol[:, L - LAST - VOL_PERIOD:L - VOL_PERIOD]
    vc7 = (v_now - v_prev) / (v_prev + 1e-8)
    # TODO(synk): the reference also computes a stochastic oscillator whose result is
    # never used in forward(); it is dead code and omitted here.

    # ---- batch-tile the per-channel params to the N = B*C rows with a 0/1 selection
    #      matmul: keeps the broadcast fully in-kernel (exact up to MXU rounding). ----
    rsel = lax.broadcasted_iota(jnp.int32, (N, C), 0)
    csel = lax.broadcasted_iota(jnp.int32, (N, C), 1)
    pick = rsel == csel
    for b in range(1, B):                                             # B is static
        pick = pick | (rsel == csel + b * C)
    tile_b = pick.astype(f32)                                         # (N, C)
    ce_n = jnp.dot(tile_b, ce_ref[...], preferred_element_type=f32)   # (N, 16)
    logits_n = jnp.dot(tile_b, logits_ref[...], preferred_element_type=f32)  # (N, 4*P)

    # ---- both MLP stacks in one body (dropout is an inference no-op) ----
    def mlp(x, w1, b1, w2, b2, w3, b3):
        h = jnp.maximum(jnp.dot(x, w1, preferred_element_type=f32) + b1, 0.0)
        h = jnp.maximum(jnp.dot(h, w2, preferred_element_type=f32) + b2, 0.0)
        return jnp.dot(h, w3, preferred_element_type=f32) + b3

    x_boll = jnp.concatenate([sma7, std7, ce_n], axis=1)              # (N, 30)
    qa_x = jnp.concatenate([vc7, rsi7, obv7, x_boll], axis=1)         # (N, 51)
    boll_emb = mlp(x_boll, bw1_ref[...], bb1_ref[...], bw2_ref[...], bb2_ref[...],
                   bw3_ref[...], bb3_ref[...])                        # (N, 4*O), anchor-major
    qa_emb = mlp(qa_x, qw1_ref[...], qb1_ref[...], qw2_ref[...], qb2_ref[...],
                 qw3_ref[...], qb3_ref[...])                          # (N, P), p = hz*O + o

    # ---- 4-anchor mixture: per-anchor (N, P) slabs, explicit softmax over anchors ----
    one_plus = 1.0 + jax.nn.sigmoid(boll_emb)                         # (N, 4*O)
    z = []
    for a in range(4):                                                # anchors: close-mean,
        sc = one_plus[:, a * O:(a + 1) * O]                           #  recent, high, low
        sc = jnp.concatenate([sc] * HZ, axis=1)                       # (N, P): tile over HZ
        z.append(logits_n[:, a * P:(a + 1) * P] * sc)
    zmax = jnp.maximum(jnp.maximum(z[0], z[1]), jnp.maximum(z[2], z[3]))
    e = [jnp.exp(za - zmax) for za in z]
    inv_denom = pl.reciprocal(e[0] + e[1] + e[2] + e[3], approx=True)
    weighted = (e[0] * close_mean + e[1] * recent + e[2] * hi + e[3] * lo) * inv_denom

    alpha_sig = jax.nn.sigmoid(jnp.full((1, 1), alpha_ref[0, 0], dtype=f32))
    o_ref[...] = weighted + jnp.tanh(qa_emb) * alpha_sig


# ------------------------------- forward wrapper --------------------------------

def common_metrics_forward(params, historical_data):
    B, C, L, F = historical_data.shape
    assert F >= 5 and L >= LAST + VOL_PERIOD
    logits = params['price_mixture_logits']            # (C, HZ, O, 4)
    _, HZ, O, _ = logits.shape
    P = HZ * O
    N = B * C

    # Feature slices the kernel reads (lookback in the lane dim).
    high = historical_data[..., 1].reshape(N, L)
    low = historical_data[..., 2].reshape(N, L)
    close = historical_data[..., 3].reshape(N, L)
    volume = historical_data[..., 4].reshape(N, L)

    bw1, bb1, bw2, bb2, bw3, bb3 = params['bollinger_mlp']
    qw1, qb1, qw2, qb2, qw3, qb3 = params['qa_mlp']

    # Tiny one-off parameter relayouts (fused by XLA): bollinger head -> anchor-major
    # columns; price_mixture_logits -> (C, 4*HZ*O) anchor-major, so the kernel only needs
    # contiguous static lane slices per anchor.
    hidden = bw3.shape[0]
    bw3p = bw3.reshape(hidden, O, 4).transpose(0, 2, 1).reshape(hidden, 4 * O)
    bb3p = bb3.reshape(1, O, 4).transpose(0, 2, 1).reshape(1, 4 * O)
    logits_t = jnp.transpose(logits, (0, 3, 1, 2)).reshape(C, 4 * P)

    vmem = pl.BlockSpec(memory_space=pltpu.MemorySpace.VMEM)
    smem = pl.BlockSpec(memory_space=pltpu.MemorySpace.SMEM)

    out = pl.pallas_call(
        _fused_forward_kernel,
        out_shape=jax.ShapeDtypeStruct((N, P), jnp.float32),
        in_specs=[vmem] * 18 + [smem],
        out_specs=vmem,
    )(close, high, low, volume, params['channel_embeddings'],
      bw1, bb1, bw2, bb2, bw3p, bb3p,
      qw1, qb1, qw2, qb2, qw3, qb3,
      logits_t, params['alpha'])
    return out.reshape(B, C, HZ, O)


# ------------------------------- parameters -------------------------------------
# TODO(synk): MLPBlock, statistical_bollinger_bands, compute_obv, compute_rolling_rsi,
# compute_stochastic_oscillator and compute_volume_change are not defined in models.py;
# standard definitions (3x Linear with ReLU, mask-based rolling stats) are used here.
# The reference's rsi_mlp is constructed but never used in forward() -> omitted.

def init_params(key, num_channels, horizon, num_outputs):
    def linear(k, din, dout):
        k1, k2 = jax.random.split(k)
        bound = 1.0 / math.sqrt(din)
        w = jax.random.uniform(k1, (din, dout), jnp.float32, minval=-bound, maxval=bound)
        b = jax.random.uniform(k2, (1, dout), jnp.float32, minval=-bound, maxval=bound)
        return w, b

    def mlp_params(k, din, hidden, dout):
        k1, k2, k3 = jax.random.split(k, 3)
        w1, b1 = linear(k1, din, hidden)
        w2, b2 = linear(k2, hidden, hidden)
        w3, b3 = linear(k3, hidden, dout)
        return (w1, b1, w2, b2, w3, b3)

    ks = jax.random.split(key, 5)
    return {
        'bollinger_mlp': mlp_params(ks[0], 2 * 7 + 16, 32, 4 * num_outputs),
        'qa_mlp': mlp_params(ks[1], 7 * 5 + 16, 32, num_outputs * horizon),
        'channel_embeddings': jax.random.normal(ks[2], (num_channels, 16), jnp.float32),
        'alpha': jax.random.normal(ks[3], (1, 1), jnp.float32),
        'price_mixture_logits': jax.random.normal(
            ks[4], (num_channels, horizon, num_outputs, 4), jnp.float32),
    }


# ---------------------------------- main -----------------------------------------

if __name__ == "__main__":
    B, C, L, HZ, F = 2, 4, 16, 8, 6          # batch, channels, lookback, horizon, features
    quantiles = [0.1, 0.5, 0.9]
    O = len(quantiles)

    key = jax.random.PRNGKey(0)
    k_data, k_params = jax.random.split(key)
    historical_data = jax.random.uniform(
        k_data, (B, C, L, F), jnp.float32, minval=1.0, maxval=2.0) * 100.0
    params = init_params(k_params, C, HZ, O)

    fwd = jax.jit(common_metrics_forward)
    out = fwd(params, historical_data)
    jax.block_until_ready(out)

    assert out.shape == (B, C, HZ, O), out.shape
    assert bool(jnp.all(jnp.isfinite(out)))
    print("KERNEL_OK")
</pallas_src>

<mosaic_0001>
module attributes {stable_mosaic.version = 11 : i64} {
  func.func @_fused_forward_kernel(%arg0: memref<8x16xf32, #tpu.memory_space<vmem>>, %arg1: memref<8x16xf32, #tpu.memory_space<vmem>>, %arg2: memref<8x16xf32, #tpu.memory_space<vmem>>, %arg3: memref<8x16xf32, #tpu.memory_space<vmem>>, %arg4: memref<4x16xf32, #tpu.memory_space<vmem>>, %arg5: memref<30x32xf32, #tpu.memory_space<vmem>>, %arg6: memref<1x32xf32, #tpu.memory_space<vmem>>, %arg7: memref<32x32xf32, #tpu.memory_space<vmem>>, %arg8: memref<1x32xf32, #tpu.memory_space<vmem>>, %arg9: memref<32x12xf32, #tpu.memory_space<vmem>>, %arg10: memref<1x12xf32, #tpu.memory_space<vmem>>, %arg11: memref<51x32xf32, #tpu.memory_space<vmem>>, %arg12: memref<1x32xf32, #tpu.memory_space<vmem>>, %arg13: memref<32x32xf32, #tpu.memory_space<vmem>>, %arg14: memref<1x32xf32, #tpu.memory_space<vmem>>, %arg15: memref<32x24xf32, #tpu.memory_space<vmem>>, %arg16: memref<1x24xf32, #tpu.memory_space<vmem>>, %arg17: memref<4x96xf32, #tpu.memory_space<vmem>>, %arg18: memref<1x1xf32, #tpu.memory_space<smem>>, %arg19: memref<8x24xf32, #tpu.memory_space<vmem>>) attributes {dimension_semantics = [], scalar_prefetch = 0 : i64, scratch_operands = 0 : i64, tpu.core_type = #tpu.core_type<tc>} {
    %c0 = arith.constant 0 : index
    %c0_0 = arith.constant 0 : index
    %0 = vector.load %arg0[%c0, %c0_0] : memref<8x16xf32, #tpu.memory_space<vmem>>, vector<8x16xf32>
    %c0_1 = arith.constant 0 : index
    %c0_2 = arith.constant 0 : index
    %1 = vector.load %arg1[%c0_1, %c0_2] : memref<8x16xf32, #tpu.memory_space<vmem>>, vector<8x16xf32>
    %c0_3 = arith.constant 0 : index
    %c0_4 = arith.constant 0 : index
    %2 = vector.load %arg2[%c0_3, %c0_4] : memref<8x16xf32, #tpu.memory_space<vmem>>, vector<8x16xf32>
    %c0_5 = arith.constant 0 : index
    %c0_6 = arith.constant 0 : index
    %3 = vector.load %arg3[%c0_5, %c0_6] : memref<8x16xf32, #tpu.memory_space<vmem>>, vector<8x16xf32>
    %4 = tpu.iota {dimensions = array<i32: 0>} : vector<16x7xi32>
    %5 = tpu.iota {dimensions = array<i32: 1>} : vector<16x7xi32>
    %c9_i32 = arith.constant 9 : i32
    %6 = vector.broadcast %c9_i32 : i32 to vector<16x7xi32>
    %7 = arith.addi %5, %6 : vector<16x7xi32>
    %8 = arith.cmpi sle, %4, %7 : vector<16x7xi32>
    %c14_i32 = arith.constant 14 : i32
    %9 = vector.broadcast %c14_i32 : i32 to vector<16x7xi32>
    %10 = arith.subi %7, %9 : vector<16x7xi32>
    %11 = arith.cmpi sgt, %4, %10 : vector<16x7xi32>
    %12 = arith.andi %8, %11 : vector<16x7xi1>
    %13 = arith.extui %12 : vector<16x7xi1> to vector<16x7xi32>
    %14 = arith.sitofp %13 : vector<16x7xi32> to vector<16x7xf32>
    %15 = vector.extract_strided_slice %7 {offsets = [0, 0], sizes = [1, 7], strides = [1, 1]} : vector<16x7xi32> to vector<1x7xi32>
    %c1_i32 = arith.constant 1 : i32
    %16 = vector.broadcast %c1_i32 : i32 to vector<1x7xi32>
    %17 = arith.addi %15, %16 : vector<1x7xi32>
    %c14_i32_7 = arith.constant 14 : i32
    %18 = vector.broadcast %c14_i32_7 : i32 to vector<1x7xi32>
    %19 = arith.minsi %17, %18 : vector<1x7xi32>
    %20 = arith.sitofp %19 : vector<1x7xi32> to vector<1x7xf32>
    %cst = arith.constant 1.000000e+00 : f32
    %21 = vector.broadcast %cst : f32 to vector<1x7xf32>
    %22 = arith.divf %21, %20 : vector<1x7xf32>
    %23 = tpu.iota {dimensions = array<i32: 0>} : vector<16x7xi32>
    %24 = tpu.iota {dimensions = array<i32: 1>} : vector<16x7xi32>
    %c9_i32_8 = arith.constant 9 : i32
    %25 = vector.broadcast %c9_i32_8 : i32 to vector<16x7xi32>
    %26 = arith.addi %24, %25 : vector<16x7xi32>
    %27 = arith.cmpi sle, %23, %26 : vector<16x7xi32>
    %c16_i32 = arith.constant 16 : i32
    %28 = vector.broadcast %c16_i32 : i32 to vector<16x7xi32>
    %29 = arith.subi %26, %28 : vector<16x7xi32>
    %30 = arith.cmpi sgt, %23, %29 : vector<16x7xi32>
    %31 = arith.andi %27, %30 : vector<16x7xi1>
    %32 = arith.extui %31 : vector<16x7xi1> to vector<16x7xi32>
    %33 = arith.sitofp %32 : vector<16x7xi32> to vector<16x7xf32>
    %cst_9 = arith.constant dense<0.000000e+00> : vector<8xf32>
    %34 = vector.multi_reduction <add>, %0, %cst_9 [1] : vector<8x16xf32> to vector<8xf32>
    %35 = vector.shape_cast %34 : vector<8xf32> to vector<8x1xf32>
    %cst_10 = arith.constant 1.600000e+01 : f32
    %36 = vector.broadcast %cst_10 : f32 to vector<8x1xf32>
    %37 = arith.divf %35, %36 : vector<8x1xf32>
    %38 = vector.extract_strided_slice %0 {offsets = [0, 15], sizes = [8, 1], strides = [1, 1]} : vector<8x16xf32> to vector<8x1xf32>
    %cst_11 = arith.constant dense<0xFF800000> : vector<8xf32>
    %39 = vector.multi_reduction <maximumf>, %1, %cst_11 [1] : vector<8x16xf32> to vector<8xf32>
    %40 = vector.shape_cast %39 : vector<8xf32> to vector<8x1xf32>
    %cst_12 = arith.constant dense<0x7F800000> : vector<8xf32>
    %41 = vector.multi_reduction <minimumf>, %2, %cst_12 [1] : vector<8x16xf32> to vector<8xf32>
    %42 = vector.shape_cast %41 : vector<8xf32> to vector<8x1xf32>
    %43 = vector.broadcast %37 : vector<8x1xf32> to vector<8x16xf32>
    %44 = arith.subf %0, %43 : vector<8x16xf32>
    %cst_13 = arith.constant dense<0.000000e+00> : vector<8x7xf32>
    %45 = tpu.matmul %44, %14, %cst_13 {dimension_numbers = #tpu.dot_dimension_numbers<[1], [0], [0], [1], [0, 0, 1, 1], [], []>} : vector<8x16xf32>, vector<16x7xf32>, vector<8x7xf32> -> vector<8x7xf32>
    %46 = vector.broadcast %22 : vector<1x7xf32> to vector<8x7xf32>
    %47 = arith.mulf %45, %46 : vector<8x7xf32>
    %48 = arith.mulf %44, %44 : vector<8x16xf32>
    %cst_14 = arith.constant dense<0.000000e+00> : vector<8x7xf32>
    %49 = tpu.matmul %48, %14, %cst_14 {dimension_numbers = #tpu.dot_dimension_numbers<[1], [0], [0], [1], [0, 0, 1, 1], [], []>} : vector<8x16xf32>, vector<16x7xf32>, vector<8x7xf32> -> vector<8x7xf32>
    %50 = vector.broadcast %22 : vector<1x7xf32> to vector<8x7xf32>
    %51 = arith.mulf %49, %50 : vector<8x7xf32>
    %52 = vector.broadcast %37 : vector<8x1xf32> to vector<8x7xf32>
    %53 = arith.addf %47, %52 : vector<8x7xf32>
    %54 = arith.mulf %47, %47 : vector<8x7xf32>
    %55 = arith.subf %51, %54 : vector<8x7xf32>
    %cst_15 = arith.constant 0.000000e+00 : f32
    %56 = vector.broadcast %cst_15 : f32 to vector<8x7xf32>
    %57 = arith.maximumf %55, %56 : vector<8x7xf32>
    %58 = math.sqrt %57 : vector<8x7xf32>
    %59 = vector.extract_strided_slice %0 {offsets = [0, 0], sizes = [8, 1], strides = [1, 1]} : vector<8x16xf32> to vector<8x1xf32>
    %60 = vector.extract_strided_slice %0 {offsets = [0, 0], sizes = [8, 15], strides = [1, 1]} : vector<8x16xf32> to vector<8x15xf32>
    %61 = tpu.concatenate %59, %60 in 1 : vector<8x1xf32>, vector<8x15xf32> -> vector<8x16xf32>
    %62 = arith.subf %0, %61 : vector<8x16xf32>
    %cst_16 = arith.constant 0.000000e+00 : f32
    %63 = vector.broadcast %cst_16 : f32 to vector<8x16xf32>
    %64 = arith.cmpf ogt, %62, %63 : vector<8x16xf32>
    %cst_17 = arith.constant 1.000000e+00 : f32
    %cst_18 = arith.constant 0.000000e+00 : f32
    %65 = vector.broadcast %cst_17 : f32 to vector<8x16xf32>
    %66 = vector.broadcast %cst_18 : f32 to vector<8x16xf32>
    %67 = arith.select %64, %65, %66 : vector<8x16xi1>, vector<8x16xf32>
    %cst_19 = arith.constant 0.000000e+00 : f32
    %68 = vector.broadcast %cst_19 : f32 to vector<8x16xf32>
    %69 = arith.cmpf olt, %62, %68 : vector<8x16xf32>
    %cst_20 = arith.constant 1.000000e+00 : f32
    %cst_21 = arith.constant 0.000000e+00 : f32
    %70 = vector.broadcast %cst_20 : f32 to vector<8x16xf32>
    %71 = vector.broadcast %cst_21 : f32 to vector<8x16xf32>
    %72 = arith.select %69, %70, %71 : vector<8x16xi1>, vector<8x16xf32>
    %73 = arith.subf %67, %72 : vector<8x16xf32>
    %74 = arith.mulf %73, %3 : vector<8x16xf32>
    %cst_22 = arith.constant dense<0.000000e+00> : vector<8x7xf32>
    %75 = tpu.matmul %74, %33, %cst_22 {dimension_numbers = #tpu.dot_dimension_numbers<[1], [0], [0], [1], [0, 0, 1, 1], [], []>} : vector<8x16xf32>, vector<16x7xf32>, vector<8x7xf32> -> vector<8x7xf32>
    %cst_23 = arith.constant 0.000000e+00 : f32
    %76 = vector.broadcast %cst_23 : f32 to vector<8x16xf32>
    %77 = arith.maximumf %62, %76 : vector<8x16xf32>
    %cst_24 = arith.constant dense<0.000000e+00> : vector<8x7xf32>
    %78 = tpu.matmul %77, %14, %cst_24 {dimension_numbers = #tpu.dot_dimension_numbers<[1], [0], [0], [1], [0, 0, 1, 1], [], []>} : vector<8x16xf32>, vector<16x7xf32>, vector<8x7xf32> -> vector<8x7xf32>
    %79 = vector.broadcast %22 : vector<1x7xf32> to vector<8x7xf32>
    %80 = arith.mulf %78, %79 : vector<8x7xf32>
    %cst_25 = arith.constant 0.000000e+00 : f32
    %81 = vector.broadcast %cst_25 : f32 to vector<8x16xf32>
    %82 = arith.subf %81, %62 : vector<8x16xf32>
    %cst_26 = arith.constant 0.000000e+00 : f32
    %83 = vector.broadcast %cst_26 : f32 to vector<8x16xf32>
    %84 = arith.maximumf %82, %83 : vector<8x16xf32>
    %cst_27 = arith.constant dense<0.000000e+00> : vector<8x7xf32>
    %85 = tpu.matmul %84, %14, %cst_27 {dimension_numbers = #tpu.dot_dimension_numbers<[1], [0], [0], [1], [0, 0, 1, 1], [], []>} : vector<8x16xf32>, vector<16x7xf32>, vector<8x7xf32> -> vector<8x7xf32>
    %86 = vector.broadcast %22 : vector<1x7xf32> to vector<8x7xf32>
    %87 = arith.mulf %85, %86 : vector<8x7xf32>
    %cst_28 = arith.constant 1.000000e+02 : f32
    %88 = vector.broadcast %cst_28 : f32 to vector<8x7xf32>
    %89 = arith.mulf %88, %80 : vector<8x7xf32>
    %90 = arith.addf %80, %87 : vector<8x7xf32>
    %cst_29 = arith.constant 9.99999993E-9 : f32
    %91 = vector.broadcast %cst_29 : f32 to vector<8x7xf32>
    %92 = arith.addf %90, %91 : vector<8x7xf32>
    %93 = arith.divf %89, %92 : vector<8x7xf32>
    %94 = vector.extract_strided_slice %3 {offsets = [0, 9], sizes = [8, 7], strides = [1, 1]} : vector<8x16xf32> to vector<8x7xf32>
    %95 = vector.extract_strided_slice %3 {offsets = [0, 4], sizes = [8, 7], strides = [1, 1]} : vector<8x16xf32> to vector<8x7xf32>
    %96 = arith.subf %94, %95 : vector<8x7xf32>
    %cst_30 = arith.constant 9.99999993E-9 : f32
    %97 = vector.broadcast %cst_30 : f32 to vector<8x7xf32>
    %98 = arith.addf %95, %97 : vector<8x7xf32>
    %99 = arith.divf %96, %98 : vector<8x7xf32>
    %100 = tpu.iota {dimensions = array<i32: 0>} : vector<8x4xi32>
    %101 = tpu.iota {dimensions = array<i32: 1>} : vector<8x4xi32>
    %102 = arith.cmpi eq, %100, %101 : vector<8x4xi32>
    %c4_i32 = arith.constant 4 : i32
    %103 = vector.broadcast %c4_i32 : i32 to vector<8x4xi32>
    %104 = arith.addi %101, %103 : vector<8x4xi32>
    %105 = arith.cmpi eq, %100, %104 : vector<8x4xi32>
    %106 = arith.ori %102, %105 : vector<8x4xi1>
    %107 = arith.extui %106 : vector<8x4xi1> to vector<8x4xi32>
    %108 = arith.sitofp %107 : vector<8x4xi32> to vector<8x4xf32>
    %c0_31 = arith.constant 0 : index
    %c0_32 = arith.constant 0 : index
    %109 = vector.load %arg4[%c0_31, %c0_32] : memref<4x16xf32, #tpu.memory_space<vmem>>, vector<4x16xf32>
    %cst_33 = arith.constant dense<0.000000e+00> : vector<8x16xf32>
    %110 = tpu.matmul %108, %109, %cst_33 {dimension_numbers = #tpu.dot_dimension_numbers<[1], [0], [0], [1], [0, 0, 1, 1], [], []>} : vector<8x4xf32>, vector<4x16xf32>, vector<8x16xf32> -> vector<8x16xf32>
    %c0_34 = arith.constant 0 : index
    %c0_35 = arith.constant 0 : index
    %111 = vector.load %arg17[%c0_34, %c0_35] : memref<4x96xf32, #tpu.memory_space<vmem>>, vector<4x96xf32>
    %cst_36 = arith.constant dense<0.000000e+00> : vector<8x96xf32>
    %112 = tpu.matmul %108, %111, %cst_36 {dimension_numbers = #tpu.dot_dimension_numbers<[1], [0], [0], [1], [0, 0, 1, 1], [], []>} : vector<8x4xf32>, vector<4x96xf32>, vector<8x96xf32> -> vector<8x96xf32>
    %113 = tpu.concatenate %53, %58, %110 in 1 : vector<8x7xf32>, vector<8x7xf32>, vector<8x16xf32> -> vector<8x30xf32>
    %114 = tpu.concatenate %99, %93, %75, %113 in 1 : vector<8x7xf32>, vector<8x7xf32>, vector<8x7xf32>, vector<8x30xf32> -> vector<8x51xf32>
    %c0_37 = arith.constant 0 : index
    %c0_38 = arith.constant 0 : index
    %115 = vector.load %arg5[%c0_37, %c0_38] : memref<30x32xf32, #tpu.memory_space<vmem>>, vector<30x32xf32>
    %c0_39 = arith.constant 0 : index
    %c0_40 = arith.constant 0 : index
    %116 = vector.load %arg6[%c0_39, %c0_40] : memref<1x32xf32, #tpu.memory_space<vmem>>, vector<1x32xf32>
    %c0_41 = arith.constant 0 : index
    %c0_42 = arith.constant 0 : index
    %117 = vector.load %arg7[%c0_41, %c0_42] : memref<32x32xf32, #tpu.memory_space<vmem>>, vector<32x32xf32>
    %c0_43 = arith.constant 0 : index
    %c0_44 = arith.constant 0 : index
    %118 = vector.load %arg8[%c0_43, %c0_44] : memref<1x32xf32, #tpu.memory_space<vmem>>, vector<1x32xf32>
    %c0_45 = arith.constant 0 : index
    %c0_46 = arith.constant 0 : index
    %119 = vector.load %arg9[%c0_45, %c0_46] : memref<32x12xf32, #tpu.memory_space<vmem>>, vector<32x12xf32>
    %c0_47 = arith.constant 0 : index
    %c0_48 = arith.constant 0 : index
    %120 = vector.load %arg10[%c0_47, %c0_48] : memref<1x12xf32, #tpu.memory_space<vmem>>, vector<1x12xf32>
    %cst_49 = arith.constant dense<0.000000e+00> : vector<8x32xf32>
    %121 = tpu.matmul %113, %115, %cst_49 {dimension_numbers = #tpu.dot_dimension_numbers<[1], [0], [0], [1], [0, 0, 1, 1], [], []>} : vector<8x30xf32>, vector<30x32xf32>, vector<8x32xf32> -> vector<8x32xf32>
    %122 = vector.broadcast %116 : vector<1x32xf32> to vector<8x32xf32>
    %123 = arith.addf %121, %122 : vector<8x32xf32>
    %cst_50 = arith.constant 0.000000e+00 : f32
    %124 = vector.broadcast %cst_50 : f32 to vector<8x32xf32>
    %125 = arith.maximumf %123, %124 : vector<8x32xf32>
    %cst_51 = arith.constant dense<0.000000e+00> : vector<8x32xf32>
    %126 = tpu.matmul %125, %117, %cst_51 {dimension_numbers = #tpu.dot_dimension_numbers<[1], [0], [0], [1], [0, 0, 1, 1], [], []>} : vector<8x32xf32>, vector<32x32xf32>, vector<8x32xf32> -> vector<8x32xf32>
    %127 = vector.broadcast %118 : vector<1x32xf32> to vector<8x32xf32>
    %128 = arith.addf %126, %127 : vector<8x32xf32>
    %cst_52 = arith.constant 0.000000e+00 : f32
    %129 = vector.broadcast %cst_52 : f32 to vector<8x32xf32>
    %130 = arith.maximumf %128, %129 : vector<8x32xf32>
    %cst_53 = arith.constant dense<0.000000e+00> : vector<8x12xf32>
    %131 = tpu.matmul %130, %119, %cst_53 {dimension_numbers = #tpu.dot_dimension_numbers<[1], [0], [0], [1], [0, 0, 1, 1], [], []>} : vector<8x32xf32>, vector<32x12xf32>, vector<8x12xf32> -> vector<8x12xf32>
    %132 = vector.broadcast %120 : vector<1x12xf32> to vector<8x12xf32>
    %133 = arith.addf %131, %132 : vector<8x12xf32>
    %c0_54 = arith.constant 0 : index
    %c0_55 = arith.constant 0 : index
    %134 = vector.load %arg11[%c0_54, %c0_55] : memref<51x32xf32, #tpu.memory_space<vmem>>, vector<51x32xf32>
    %c0_56 = arith.constant 0 : index
    %c0_57 = arith.constant 0 : index
    %135 = vector.load %arg12[%c0_56, %c0_57] : memref<1x32xf32, #tpu.memory_space<vmem>>, vector<1x32xf32>
    %c0_58 = arith.constant 0 : index
    %c0_59 = arith.constant 0 : index
    %136 = vector.load %arg13[%c0_58, %c0_59] : memref<32x32xf32, #tpu.memory_space<vmem>>, vector<32x32xf32>
    %c0_60 = arith.constant 0 : index
    %c0_61 = arith.constant 0 : index
    %137 = vector.load %arg14[%c0_60, %c0_61] : memref<1x32xf32, #tpu.memory_space<vmem>>, vector<1x32xf32>
    %c0_62 = arith.constant 0 : index
    %c0_63 = arith.constant 0 : index
    %138 = vector.load %arg15[%c0_62, %c0_63] : memref<32x24xf32, #tpu.memory_space<vmem>>, vector<32x24xf32>
    %c0_64 = arith.constant 0 : index
    %c0_65 = arith.constant 0 : index
    %139 = vector.load %arg16[%c0_64, %c0_65] : memref<1x24xf32, #tpu.memory_space<vmem>>, vector<1x24xf32>
    %cst_66 = arith.constant dense<0.000000e+00> : vector<8x32xf32>
    %140 = tpu.matmul %114, %134, %cst_66 {dimension_numbers = #tpu.dot_dimension_numbers<[1], [0], [0], [1], [0, 0, 1, 1], [], []>} : vector<8x51xf32>, vector<51x32xf32>, vector<8x32xf32> -> vector<8x32xf32>
    %141 = vector.broadcast %135 : vector<1x32xf32> to vector<8x32xf32>
    %142 = arith.addf %140, %141 : vector<8x32xf32>
    %cst_67 = arith.constant 0.000000e+00 : f32
    %143 = vector.broadcast %cst_67 : f32 to vector<8x32xf32>
    %144 = arith.maximumf %142, %143 : vector<8x32xf32>
    %cst_68 = arith.constant dense<0.000000e+00> : vector<8x32xf32>
    %145 = tpu.matmul %144, %136, %cst_68 {dimension_numbers = #tpu.dot_dimension_numbers<[1], [0], [0], [1], [0, 0, 1, 1], [], []>} : vector<8x32xf32>, vector<32x32xf32>, vector<8x32xf32> -> vector<8x32xf32>
    %146 = vector.broadcast %137 : vector<1x32xf32> to vector<8x32xf32>
    %147 = arith.addf %145, %146 : vector<8x32xf32>
    %cst_69 = arith.constant 0.000000e+00 : f32
    %148 = vector.broadcast %cst_69 : f32 to vector<8x32xf32>
    %149 = arith.maximumf %147, %148 : vector<8x32xf32>
    %cst_70 = arith.constant dense<0.000000e+00> : vector<8x24xf32>
    %150 = tpu.matmul %149, %138, %cst_70 {dimension_numbers = #tpu.dot_dimension_numbers<[1], [0], [0], [1], [0, 0, 1, 1], [], []>} : vector<8x32xf32>, vector<32x24xf32>, vector<8x24xf32> -> vector<8x24xf32>
    %151 = vector.broadcast %139 : vector<1x24xf32> to vector<8x24xf32>
    %152 = arith.addf %150, %151 : vector<8x24xf32>
    %153 = arith.negf %133 : vector<8x12xf32>
    %154 = math.exp %153 : vector<8x12xf32>
    %cst_71 = arith.constant 1.000000e+00 : f32
    %155 = vector.broadcast %cst_71 : f32 to vector<8x12xf32>
    %156 = arith.addf %155, %154 : vector<8x12xf32>
    %157 = arith.divf %155, %156 : vector<8x12xf32>
    %cst_72 = arith.constant 1.000000e+00 : f32
    %158 = vector.broadcast %cst_72 : f32 to vector<8x12xf32>
    %159 = arith.addf %158, %157 : vector<8x12xf32>
    %160 = vector.extract_strided_slice %159 {offsets = [0, 0], sizes = [8, 3], strides = [1, 1]} : vector<8x12xf32> to vector<8x3xf32>
    %161 = tpu.concatenate %160, %160, %160, %160, %160, %160, %160, %160 in 1 : vector<8x3xf32>, vector<8x3xf32>, vector<8x3xf32>, vector<8x3xf32>, vector<8x3xf32>, vector<8x3xf32>, vector<8x3xf32>, vector<8x3xf32> -> vector<8x24xf32>
    %162 = vector.extract_strided_slice %112 {offsets = [0, 0], sizes = [8, 24], strides = [1, 1]} : vector<8x96xf32> to vector<8x24xf32>
    %163 = arith.mulf %162, %161 : vector<8x24xf32>
    %164 = vector.extract_strided_slice %159 {offsets = [0, 3], sizes = [8, 3], strides = [1, 1]} : vector<8x12xf32> to vector<8x3xf32>
    %165 = tpu.concatenate %164, %164, %164, %164, %164, %164, %164, %164 in 1 : vector<8x3xf32>, vector<8x3xf32>, vector<8x3xf32>, vector<8x3xf32>, vector<8x3xf32>, vector<8x3xf32>, vector<8x3xf32>, vector<8x3xf32> -> vector<8x24xf32>
    %166 = vector.extract_strided_slice %112 {offsets = [0, 24], sizes = [8, 24], strides = [1, 1]} : vector<8x96xf32> to vector<8x24xf32>
    %167 = arith.mulf %166, %165 : vector<8x24xf32>
    %168 = vector.extract_strided_slice %159 {offsets = [0, 6], sizes = [8, 3], strides = [1, 1]} : vector<8x12xf32> to vector<8x3xf32>
    %169 = tpu.concatenate %168, %168, %168, %168, %168, %168, %168, %168 in 1 : vector<8x3xf32>, vector<8x3xf32>, vector<8x3xf32>, vector<8x3xf32>, vector<8x3xf32>, vector<8x3xf32>, vector<8x3xf32>, vector<8x3xf32> -> vector<8x24xf32>
    %170 = vector.extract_strided_slice %112 {offsets = [0, 48], sizes = [8, 24], strides = [1, 1]} : vector<8x96xf32> to vector<8x24xf32>
    %171 = arith.mulf %170, %169 : vector<8x24xf32>
    %172 = vector.extract_strided_slice %159 {offsets = [0, 9], sizes = [8, 3], strides = [1, 1]} : vector<8x12xf32> to vector<8x3xf32>
    %173 = tpu.concatenate %172, %172, %172, %172, %172, %172, %172, %172 in 1 : vector<8x3xf32>, vector<8x3xf32>, vector<8x3xf32>, vector<8x3xf32>, vector<8x3xf32>, vector<8x3xf32>, vector<8x3xf32>, vector<8x3xf32> -> vector<8x24xf32>
    %174 = vector.extract_strided_slice %112 {offsets = [0, 72], sizes = [8, 24], strides = [1, 1]} : vector<8x96xf32> to vector<8x24xf32>
    %175 = arith.mulf %174, %173 : vector<8x24xf32>
    %176 = arith.maximumf %163, %167 : vector<8x24xf32>
    %177 = arith.maximumf %171, %175 : vector<8x24xf32>
    %178 = arith.maximumf %176, %177 : vector<8x24xf32>
    %179 = arith.subf %163, %178 : vector<8x24xf32>
    %180 = math.exp %179 : vector<8x24xf32>
    %181 = arith.subf %167, %178 : vector<8x24xf32>
    %182 = math.exp %181 : vector<8x24xf32>
    %183 = arith.subf %171, %178 : vector<8x24xf32>
    %184 = math.exp %183 : vector<8x24xf32>
    %185 = arith.subf %175, %178 : vector<8x24xf32>
    %186 = math.exp %185 : vector<8x24xf32>
    %187 = arith.addf %180, %182 : vector<8x24xf32>
    %188 = arith.addf %187, %184 : vector<8x24xf32>
    %189 = arith.addf %188, %186 : vector<8x24xf32>
    %190 = tpu.reciprocal %189 {approx = true} : vector<8x24xf32> -> vector<8x24xf32>
    %191 = vector.broadcast %37 : vector<8x1xf32> to vector<8x24xf32>
    %192 = arith.mulf %180, %191 : vector<8x24xf32>
    %193 = vector.broadcast %38 : vector<8x1xf32> to vector<8x24xf32>
    %194 = arith.mulf %182, %193 : vector<8x24xf32>
    %195 = arith.addf %192, %194 : vector<8x24xf32>
    %196 = vector.broadcast %40 : vector<8x1xf32> to vector<8x24xf32>
    %197 = arith.mulf %184, %196 : vector<8x24xf32>
    %198 = arith.addf %195, %197 : vector<8x24xf32>
    %199 = vector.broadcast %42 : vector<8x1xf32> to vector<8x24xf32>
    %200 = arith.mulf %186, %199 : vector<8x24xf32>
    %201 = arith.addf %198, %200 : vector<8x24xf32>
    %202 = arith.mulf %201, %190 : vector<8x24xf32>
    %c0_73 = arith.constant 0 : index
    %c0_74 = arith.constant 0 : index
    %203 = memref.load %arg18[%c0_73, %c0_74] : memref<1x1xf32, #tpu.memory_space<smem>>
    %204 = vector.broadcast %203 : f32 to vector<1x1xf32>
    %205 = arith.negf %204 : vector<1x1xf32>
    %206 = math.exp %205 : vector<1x1xf32>
    %cst_75 = arith.constant 1.000000e+00 : f32
    %207 = vector.broadcast %cst_75 : f32 to vector<1x1xf32>
    %208 = arith.addf %207, %206 : vector<1x1xf32>
    %209 = arith.divf %207, %208 : vector<1x1xf32>
    %210 = math.tanh %152 : vector<8x24xf32>
    %211 = vector.broadcast %209 : vector<1x1xf32> to vector<8x24xf32>
    %212 = arith.mulf %210, %211 : vector<8x24xf32>
    %213 = arith.addf %202, %212 : vector<8x24xf32>
    %c0_76 = arith.constant 0 : index
    %c0_77 = arith.constant 0 : index
    %214 = vector.load %arg19[%c0_76, %c0_77] : memref<8x24xf32, #tpu.memory_space<vmem>>, vector<8x24xf32>
    tpu.vector_store %arg19[%c0_76, %c0_77], %213 {strides = array<i32>} : memref<8x24xf32, #tpu.memory_space<vmem>>, vector<8x24xf32>,
    return
  }
}

</mosaic_0001>

<llo_original>
// kernel: common_metrics_forward.1
$region0: #{common_metrics_forward.1}
  #allocation0 [shape = 'u32[]', space=smem, size = 0x4, offset = 0x4, fixed_abs, tag = 'smem constant byte address 0x4 - core index']
  #allocation1 [shape = 'u32[144,128]{1,0:T(1,128)}', space=vmem, size = 0x12000, scoped, tag = 'internal scratch']
  #allocation2 [shape = 'f32[1,1]{1,0:T(1,128)S(6)}', space=smem, size = 0x200, scoped, tag = 'scoped memory for common_metrics_forward.1']
  %s0 = inlined_call_operand.vmem [shape: f32[8,16], index: 0, kind: input, shape index: {}]
  %s1 = inlined_call_operand.vmem [shape: f32[8,16], index: 1, kind: input, shape index: {}]
  %s2 = inlined_call_operand.vmem [shape: f32[8,16], index: 2, kind: input, shape index: {}]
  %s3 = inlined_call_operand.vmem [shape: f32[8,16], index: 3, kind: input, shape index: {}]
  %s4 = inlined_call_operand.vmem [shape: f32[4,16], index: 4, kind: input, shape index: {}]
  %s5 = inlined_call_operand.vmem [shape: f32[30,32], index: 5, kind: input, shape index: {}]
  %s6 = inlined_call_operand.vmem [shape: f32[1,32], index: 6, kind: input, shape index: {}]
  %s7 = inlined_call_operand.vmem [shape: f32[32,32], index: 7, kind: input, shape index: {}]
  %s8 = inlined_call_operand.vmem [shape: f32[1,32], index: 8, kind: input, shape index: {}]
  %s9 = inlined_call_operand.vmem [shape: f32[32,12], index: 9, kind: input, shape index: {}]
  %s10 = inlined_call_operand.vmem [shape: f32[1,12], index: 10, kind: input, shape index: {}]
  %s11 = inlined_call_operand.vmem [shape: f32[51,32], index: 11, kind: input, shape index: {}]
  %s12 = inlined_call_operand.vmem [shape: f32[1,32], index: 12, kind: input, shape index: {}]
  %s13 = inlined_call_operand.vmem [shape: f32[32,32], index: 13, kind: input, shape index: {}]
  %s14 = inlined_call_operand.vmem [shape: f32[1,32], index: 14, kind: input, shape index: {}]
  %s15 = inlined_call_operand.vmem [shape: f32[32,24], index: 15, kind: input, shape index: {}]
  %s16 = inlined_call_operand.vmem [shape: f32[1,24], index: 16, kind: input, shape index: {}]
  %s17 = inlined_call_operand.vmem [shape: f32[4,96], index: 17, kind: input, shape index: {}]
  %s18 = inlined_call_operand.<no memory space> [shape: f32[1,1], index: 18, kind: input, shape index: {}]
  %s19 = inlined_call_operand.vmem [shape: f32[8,24], index: 19, kind: output, shape index: {}]
  %s20 = sld [smem:[#allocation0]]
  $region86: #{common_metrics_forward.1} parent=0
    _
  %s22 = ssub.s32 1, %s20
  %s23 = scalar_select 0, %s22, %s20
  %24 = sst [smem:[#allocation2]] %s18
  // Predicated region
  $region2: #{common_metrics_forward.1} parent=0 // pred_check
    _
  $region3: #{common_metrics_forward.1} parent=0 // pred_check_branch
    %26 = sbr.rel (0) target = $region5
  $region4: #{common_metrics_forward.1} parent=0 // pred_region
    _
  $region5: #{common_metrics_forward.1} parent=0 // pred_fallthru
    _
  // Predicated region
  $region6: #{common_metrics_forward.1} parent=0 // pred_check
    _
  $region7: #{common_metrics_forward.1} parent=0 // pred_check_branch
    %28 = sbr.rel (0) target = $region9
  $region8: #{common_metrics_forward.1} parent=0 // pred_region
    _
  $region9: #{common_metrics_forward.1} parent=0 // pred_fallthru
    _
  // Predicated region
  $region10: #{common_metrics_forward.1} parent=0 // pred_check
    _
  $region11: #{common_metrics_forward.1} parent=0 // pred_check_branch
    %30 = sbr.rel (0) target = $region13
  $region12: #{common_metrics_forward.1} parent=0 // pred_region
    _
  $region13: #{common_metrics_forward.1} parent=0 // pred_fallthru
    _
  // Predicated region
  $region14: #{common_metrics_forward.1} parent=0 // pred_check
    _
  $region15: #{common_metrics_forward.1} parent=0 // pred_check_branch
    %32 = sbr.rel (0) target = $region17
  $region16: #{common_metrics_forward.1} parent=0 // pred_region
    _
  $region17: #{common_metrics_forward.1} parent=0 // pred_fallthru
    _
  // Predicated region
  $region18: #{common_metrics_forward.1} parent=0 // pred_check
    _
  $region19: #{common_metrics_forward.1} parent=0 // pred_check_branch
    %34 = sbr.rel (0) target = $region21
  $region20: #{common_metrics_forward.1} parent=0 // pred_region
    _
  $region21: #{common_metrics_forward.1} parent=0 // pred_fallthru
    _
  // Predicated region
  $region22: #{common_metrics_forward.1} parent=0 // pred_check
    _
  $region23: #{common_metrics_forward.1} parent=0 // pred_check_branch
    %36 = sbr.rel (0) target = $region25
  $region24: #{common_metrics_forward.1} parent=0 // pred_region
    _
  $region25: #{common_metrics_forward.1} parent=0 // pred_fallthru
    _
  // Predicated region
  $region26: #{common_metrics_forward.1} parent=0 // pred_check
    _
  $region27: #{common_metrics_forward.1} parent=0 // pred_check_branch
    %38 = sbr.rel (0) target = $region29
  $region28: #{common_metrics_forward.1} parent=0 // pred_region
    _
  $region29: #{common_metrics_forward.1} parent=0 // pred_fallthru
    _
  // Predicated region
  $region30: #{common_metrics_forward.1} parent=0 // pred_check
    _
  $region31: #{common_metrics_forward.1} parent=0 // pred_check_branch
    %40 = sbr.rel (0) target = $region33
  $region32: #{common_metrics_forward.1} parent=0 // pred_region
    _
  $region33: #{common_metrics_forward.1} parent=0 // pred_fallthru
    _
  // Predicated region
  $region34: #{common_metrics_forward.1} parent=0 // pred_check
    _
  $region35: #{common_metrics_forward.1} parent=0 // pred_check_branch
    %42 = sbr.rel (0) target = $region37
  $region36: #{common_metrics_forward.1} parent=0 // pred_region
    _
  $region37: #{common_metrics_forward.1} parent=0 // pred_fallthru
    _
  // Predicated region
  $region38: #{common_metrics_forward.1} parent=0 // pred_check
    _
  $region39: #{common_metrics_forward.1} parent=0 // pred_check_branch
    %44 = sbr.rel (0) target = $region41
  $region40: #{common_metrics_forward.1} parent=0 // pred_region
    _
  $region41: #{common_metrics_forward.1} parent=0 // pred_fallthru
    _
  // Predicated region
  $region42: #{common_metrics_forward.1} parent=0 // pred_check
    _
  $region43: #{common_metrics_forward.1} parent=0 // pred_check_branch
    %46 = sbr.rel (0) target = $region45
  $region44: #{common_metrics_forward.1} parent=0 // pred_region
    _
  $region45: #{common_metrics_forward.1} parent=0 // pred_fallthru
    _
  // Predicated region
  $region46: #{common_metrics_forward.1} parent=0 // pred_check
    _
  $region47: #{common_metrics_forward.1} parent=0 // pred_check_branch
    %48 = sbr.rel (0) target = $region49
  $region48: #{common_metrics_forward.1} parent=0 // pred_region
    _
  $region49: #{common_metrics_forward.1} parent=0 // pred_fallthru
    _
  // Predicated region
  $region50: #{common_metrics_forward.1} parent=0 // pred_check
    _
  $region51: #{common_metrics_forward.1} parent=0 // pred_check_branch
    %50 = sbr.rel (0) target = $region53
  $region52: #{common_metrics_forward.1} parent=0 // pred_region
    _
  $region53: #{common_metrics_forward.1} parent=0 // pred_fallthru
    _
  // Predicated region
  $region54: #{common_metrics_forward.1} parent=0 // pred_check
    _
  $region55: #{common_metrics_forward.1} parent=0 // pred_check_branch
    %52 = sbr.rel (0) target = $region57
  $region56: #{common_metrics_forward.1} parent=0 // pred_region
    _
  $region57: #{common_metrics_forward.1} parent=0 // pred_fallthru
    _
  // Predicated region
  $region58: #{common_metrics_forward.1} parent=0 // pred_check
    _
  $region59: #{common_metrics_forward.1} parent=0 // pred_check_branch
    %54 = sbr.rel (0) target = $region61
  $region60: #{common_metrics_forward.1} parent=0 // pred_region
    _
  $region61: #{common_metrics_forward.1} parent=0 // pred_fallthru
    _
  // Predicated region
  $region62: #{common_metrics_forward.1} parent=0 // pred_check
    _
  $region63: #{common_metrics_forward.1} parent=0 // pred_check_branch
    %56 = sbr.rel (0) target = $region65
  $region64: #{common_metrics_forward.1} parent=0 // pred_region
    _
  $region65: #{common_metrics_forward.1} parent=0 // pred_fallthru
    _
  // Predicated region
  $region66: #{common_metrics_forward.1} parent=0 // pred_check
    _
  $region67: #{common_metrics_forward.1} parent=0 // pred_check_branch
    %58 = sbr.rel (0) target = $region69
  $region68: #{common_metrics_forward.1} parent=0 // pred_region
    _
  $region69: #{common_metrics_forward.1} parent=0 // pred_fallthru
    _
  // Predicated region
  $region70: #{common_metrics_forward.1} parent=0 // pred_check
    _
  $region71: #{common_metrics_forward.1} parent=0 // pred_check_branch
    %60 = sbr.rel (0) target = $region73
  $region72: #{common_metrics_forward.1} parent=0 // pred_region
    _
  $region73: #{common_metrics_forward.1} parent=0 // pred_fallthru
    _
  // Predicated region
  $region74: #{common_metrics_forward.1} parent=0 // pred_check
    _
  $region75: #{common_metrics_forward.1} parent=0 // pred_check_branch
    %62 = sbr.rel (0) target = $region77
  $region76: #{common_metrics_forward.1} parent=0 // pred_region
    _
  $region77: #{common_metrics_forward.1} parent=0 // pred_fallthru
    _
  %v63 = vld [vmem:[%s0] sm:$0xff]
  %v64 = vld [vmem:[%s1] sm:$0xff]
  %v65 = vld [vmem:[%s2] sm:$0xff]
  %v66 = vld [vmem:[%s3] sm:$0xff]
  %v67 = vlaneseq
  %v68 = vshrl.u32 %v67, 7
  %v69 = vadd.s32 %v68, 8
  %v70 = vlaneseq
  %v71 = vand.u32 %v70, 127
  %v72 = vadd.s32 %v71, 9
  %vm73 = vcmp.le.s32.totalorder %v68, %v72
  %vm74 = vcmp.le.s32.totalorder %v69, %v72
  %v75 = vsub.s32 %v72, 14
  %vm76 = vcmp.gt.s32.totalorder %v68, %v75
  %vm77 = vcmp.gt.s32.totalorder %v69, %v75
  %vm78 = vmand %vm73, %vm76
  %vm79 = vmand %vm74, %vm77
  %v80 = vsel %vm78, 1, 0
  %v81 = vsel %vm79, 1, 0
  %v82 = vcvt.s32.f32 %v80
  %v83 = vcvt.s32.f32 %v81
  %v84 = vadd.s32 %v72, 1
  %vm85 = vcmp.lt.s32.totalorder %v84, 14
  %v86 = vsel %vm85, %v84, 14
  %v87 = vcvt.s32.f32 %v86
  %v88 = vrcp.pop %v87
  %v89 = vmul.f32 1.0, %v88
  %v90 = vsub.s32 %v72, 16
  %vm91 = vcmp.gt.s32.totalorder %v68, %v90
  %vm92 = vcmp.gt.s32.totalorder %v69, %v90
  %vm93 = vmand %vm73, %vm91
  %vm94 = vmand %vm74, %vm92
  %v95 = vsel %vm93, 1, 0
  %v96 = vsel %vm94, 1, 0
  %v97 = vcvt.s32.f32 %v95
  %v98 = vcvt.s32.f32 %v96
  %vm99 = vcmask 130048
  %v100 = vsel %vm99, %v63, 0.0
  %101 = vadd.xlane.f32.xlu0 %v100
  %v102 = vpop.xlane.xlu0 %101
  %v103 = vrcp.pop 16.0
  %v104 = vmul.f32 %v102, %v103
  %v105 = vsel %vm99, %v64, -inf
  %106 = vmax.xlane.f32.xlu0 %v105
  %v107 = vpop.xlane.xlu0 %106
  %v108 = vsel %vm99, %v65, inf
  %109 = vmin.xlane.f32.xlu0 %v108
  %v110 = vpop.xlane.xlu0 %109
  %v111 = vsub.f32 %v63, %v104
  %v113 = vsel %vm99, %v111, 0
  %115 = vmatprep.subr.mxu0 0.0
  %116 = vmatpush1.msra.mxu0 %v82
  %117 = vmatprep.subr.mxu0 0.0
  %118 = vmatpush1.msra.mxu0 %v83
  %119 = vmatprep.subr.mxu0 0.0
  %120 = vmatpush1.msra.mxu0 0.0
  %121 = vmatprep.subr.mxu0 0.0
  %122 = vmatpush1.msra.mxu0 0.0
  %123 = vmatprep.subr.mxu0 0.0
  %124 = vmatpush1.msra.mxu0 0.0
  %125 = vmatprep.subr.mxu0 0.0
  %126 = vmatpush1.msra.mxu0 0.0
  %127 = vmatprep.subr.mxu0 0.0
  %128 = vmatpush1.msra.mxu0 0.0
  %129 = vmatprep.subr.mxu0 0.0
  %130 = vmatpush1.msra.mxu0 0.0
  %131 = vmatprep.subr.mxu0 0.0
  %132 = vmatpush1.msra.mxu0 0.0
  %133 = vmatprep.subr.mxu0 0.0
  %134 = vmatpush1.msra.mxu0 0.0
  %135 = vmatprep.subr.mxu0 0.0
  %136 = vmatpush1.msra.mxu0 0.0
  %137 = vmatprep.subr.mxu0 0.0
  %138 = vmatpush1.msra.mxu0 0.0
  %139 = vmatprep.subr.mxu0 0.0
  %140 = vmatpush1.msra.mxu0 0.0
  %141 = vmatprep.subr.mxu0 0.0
  %142 = vmatpush1.msra.mxu0 0.0
  %143 = vmatprep.subr.mxu0 0.0
  %144 = vmatpush1.msra.mxu0 0.0
  %145 = vmatprep.subr.mxu0 0.0
  %146 = vmatpush1.msra.mxu0 0.0
  %147 = vmatprep.subr.mxu0 0.0
  %148 = vmatpush1.msra.mxu0 0.0
  %149 = vmatprep.subr.mxu0 0.0
  %150 = vmatpush1.msra.mxu0 0.0
  %151 = vmatprep.subr.mxu0 0.0
  %152 = vmatpush1.msra.mxu0 0.0
  %153 = vmatprep.subr.mxu0 0.0
  %154 = vmatpush1.msra.mxu0 0.0
  %155 = vmatprep.subr.mxu0 0.0
  %156 = vmatpush1.msra.mxu0 0.0
  %157 = vmatprep.subr.mxu0 0.0
  %158 = vmatpush1.msra.mxu0 0.0
  %159 = vmatprep.subr.mxu0 0.0
  %160 = vmatpush1.msra.mxu0 0.0
  %161 = vmatprep.subr.mxu0 0.0
  %162 = vmatpush1.msra.mxu0 0.0
  %163 = vmatprep.subr.mxu0 0.0
  %164 = vmatpush1.msra.mxu0 0.0
  %165 = vmatprep.subr.mxu0 0.0
  %166 = vmatpush1.msra.mxu0 0.0
  %167 = vmatprep.subr.mxu0 0.0
  %168 = vmatpush1.msra.mxu0 0.0
  %169 = vmatprep.subr.mxu0 0.0
  %170 = vmatpush1.msra.mxu0 0.0
  %171 = vmatprep.subr.mxu0 0.0
  %172 = vmatpush1.msra.mxu0 0.0
  %173 = vmatprep.subr.mxu0 0.0
  %174 = vmatpush1.msra.mxu0 0.0
  %175 = vmatprep.subr.mxu0 0.0
  %176 = vmatpush1.msra.mxu0 0.0
  %177 = vmatprep.subr.mxu0 0.0
  %178 = vmatpush1.msra.mxu0 0.0
  %179 = vmatprep.mubr.f32.mxu0 0.0
  %180 = vmatmul.mubr.f32.gmra.mrb[0].mxu0 %v113
  %v181 = vpop.f32.mrb[0].mxu0
  %v182 = vadd.f32 0.0, %v181
  %v183 = vpop.f32.mrb[0].mxu0
  %184 = vdwg.mxu0
  %v185 = vmul.f32 %v182, %v89
  %v186 = vmul.f32 %v111, %v111
  %v188 = vsel %vm99, %v186, 0
  %190 = vmatprep.subr.mxu0 0.0
  %191 = vmatpush1.msra.mxu0 %v82
  %192 = vmatprep.subr.mxu0 0.0
  %193 = vmatpush1.msra.mxu0 %v83
  %194 = vmatprep.subr.mxu0 0.0
  %195 = vmatpush1.msra.mxu0 0.0
  %196 = vmatprep.subr.mxu0 0.0
  %197 = vmatpush1.msra.mxu0 0.0
  %198 = vmatprep.subr.mxu0 0.0
  %199 = vmatpush1.msra.mxu0 0.0
  %200 = vmatprep.subr.mxu0 0.0
  %201 = vmatpush1.msra.mxu0 0.0
  %202 = vmatprep.subr.mxu0 0.0
  %203 = vmatpush1.msra.mxu0 0.0
  %204 = vmatprep.subr.mxu0 0.0
  %205 = vmatpush1.msra.mxu0 0.0
  %206 = vmatprep.subr.mxu0 0.0
  %207 = vmatpush1.msra.mxu0 0.0
  %208 = vmatprep.subr.mxu0 0.0
  %209 = vmatpush1.msra.mxu0 0.0
  %210 = vmatprep.subr.mxu0 0.0
  %211 = vmatpush1.msra.mxu0 0.0
  %212 = vmatprep.subr.mxu0 0.0
  %213 = vmatpush1.msra.mxu0 0.0
  %214 = vmatprep.subr.mxu0 0.0
  %215 = vmatpush1.msra.mxu0 0.0
  %216 = vmatprep.subr.mxu0 0.0
  %217 = vmatpush1.msra.mxu0 0.0
  %218 = vmatprep.subr.mxu0 0.0
  %219 = vmatpush1.msra.mxu0 0.0
  %220 = vmatprep.subr.mxu0 0.0
  %221 = vmatpush1.msra.mxu0 0.0
  %222 = vmatprep.subr.mxu0 0.0
  %223 = vmatpush1.msra.mxu0 0.0
  %224 = vmatprep.subr.mxu0 0.0
  %225 = vmatpush1.msra.mxu0 0.0
  %226 = vmatprep.subr.mxu0 0.0
  %227 = vmatpush1.msra.mxu0 0.0
  %228 = vmatprep.subr.mxu0 0.0
  %229 = vmatpush1.msra.mxu0 0.0
  %230 = vmatprep.subr.mxu0 0.0
  %231 = vmatpush1.msra.mxu0 0.0
  %232 = vmatprep.subr.mxu0 0.0
  %233 = vmatpush1.msra.mxu0 0.0
  %234 = vmatprep.subr.mxu0 0.0
  %235 = vmatpush1.msra.mxu0 0.0
  %236 = vmatprep.subr.mxu0 0.0
  %237 = vmatpush1.msra.mxu0 0.0
  %238 = vmatprep.subr.mxu0 0.0
  %239 = vmatpush1.msra.mxu0 0.0
  %240 = vmatprep.subr.mxu0 0.0
  %241 = vmatpush1.msra.mxu0 0.0
  %242 = vmatprep.subr.mxu0 0.0
  %243 = vmatpush1.msra.mxu0 0.0
  %244 = vmatprep.subr.mxu0 0.0
  %245 = vmatpush1.msra.mxu0 0.0
  %246 = vmatprep.subr.mxu0 0.0
  %247 = vmatpush1.msra.mxu0 0.0
  %248 = vmatprep.subr.mxu0 0.0
  %249 = vmatpush1.msra.mxu0 0.0
  %250 = vmatprep.subr.mxu0 0.0
  %251 = vmatpush1.msra.mxu0 0.0
  %252 = vmatprep.subr.mxu0 0.0
  %253 = vmatpush1.msra.mxu0 0.0
  %254 = vmatprep.mubr.f32.mxu0 0.0
  %255 = vmatmul.mubr.f32.gmra.mrb[0].mxu0 %v188
  %v256 = vpop.f32.mrb[0].mxu0
  %v257 = vadd.f32 0.0, %v256
  %v258 = vpop.f32.mrb[0].mxu0
  %259 = vdwg.mxu0
  %v260 = vmul.f32 %v257, %v89
  %v261 = vadd.f32 %v185, %v104
  %v262 = vmul.f32 %v185, %v185
  %v263 = vsub.f32 %v260, %v262
  %v264 = vmax.f32 %v263, 0.0
  %v265 = vrsqrt.pop %v264
  %v266 = vmul.f32 %v264, %v265
  %vm267 = vcmp.eq.f32.partialorder %v264, inf
  %v268 = vsel %vm267, %v264, %v266
  %vm269 = vcmp.eq.f32.partialorder %v264, 0.0
  %v270 = vand.u32 %v264, 2147483648
  %v271 = vsel %vm269, %v270, %v268
  %273 = vrot.lane.b32.xlu0 %v63, 1
  %v274 = vpop.permute.xlu0 %273
  %vm276 = vcmask 7168
  %v277 = vsel %vm276, %v63, %v274
  %v278 = vsub.f32 %v63, %v277
  %vm279 = vcmp.gt.f32.partialorder %v278, 0.0
  %v280 = vsel %vm279, 1.0, 0.0
  %vm281 = vcmp.lt.f32.partialorder %v278, 0.0
  %v282 = vsel %vm281, 1.0, 0.0
  %v283 = vsub.f32 %v280, %v282
  %v284 = vmul.f32 %v283, %v66
  %v286 = vsel %vm99, %v284, 0
  %288 = vmatprep.subr.mxu0 0.0
  %289 = vmatpush1.msra.mxu0 %v97
  %290 = vmatprep.subr.mxu0 0.0
  %291 = vmatpush1.msra.mxu0 %v98
  %292 = vmatprep.subr.mxu0 0.0
  %293 = vmatpush1.msra.mxu0 0.0
  %294 = vmatprep.subr.mxu0 0.0
  %295 = vmatpush1.msra.mxu0 0.0
  %296 = vmatprep.subr.mxu0 0.0
  %297 = vmatpush1.msra.mxu0 0.0
  %298 = vmatprep.subr.mxu0 0.0
  %299 = vmatpush1.msra.mxu0 0.0
  %300 = vmatprep.subr.mxu0 0.0
  %301 = vmatpush1.msra.mxu0 0.0
  %302 = vmatprep.subr.mxu0 0.0
  %303 = vmatpush1.msra.mxu0 0.0
  %304 = vmatprep.subr.mxu0 0.0
  %305 = vmatpush1.msra.mxu0 0.0
  %306 = vmatprep.subr.mxu0 0.0
  %307 = vmatpush1.msra.mxu0 0.0
  %308 = vmatprep.subr.mxu0 0.0
  %309 = vmatpush1.msra.mxu0 0.0
  %310 = vmatprep.subr.mxu0 0.0
  %311 = vmatpush1.msra.mxu0 0.0
  %312 = vmatprep.subr.mxu0 0.0
  %313 = vmatpush1.msra.mxu0 0.0
  %314 = vmatprep.subr.mxu0 0.0
  %315 = vmatpush1.msra.mxu0 0.0
  %316 = vmatprep.subr.mxu0 0.0
  %317 = vmatpush1.msra.mxu0 0.0
  %318 = vmatprep.subr.mxu0 0.0
  %319 = vmatpush1.msra.mxu0 0.0
  %320 = vmatprep.subr.mxu0 0.0
  %321 = vmatpush1.msra.mxu0 0.0
  %322 = vmatprep.subr.mxu0 0.0
  %323 = vmatpush1.msra.mxu0 0.0
  %324 = vmatprep.subr.mxu0 0.0
  %325 = vmatpush1.msra.mxu0 0.0
  %326 = vmatprep.subr.mxu0 0.0
  %327 = vmatpush1.msra.mxu0 0.0
  %328 = vmatprep.subr.mxu0 0.0
  %329 = vmatpush1.msra.mxu0 0.0
  %330 = vmatprep.subr.mxu0 0.0
  %331 = vmatpush1.msra.mxu0 0.0
  %332 = vmatprep.subr.mxu0 0.0
  %333 = vmatpush1.msra.mxu0 0.0
  %334 = vmatprep.subr.mxu0 0.0
  %335 = vmatpush1.msra.mxu0 0.0
  %336 = vmatprep.subr.mxu0 0.0
  %337 = vmatpush1.msra.mxu0 0.0
  %338 = vmatprep.subr.mxu0 0.0
  %339 = vmatpush1.msra.mxu0 0.0
  %340 = vmatprep.subr.mxu0 0.0
  %341 = vmatpush1.msra.mxu0 0.0
  %342 = vmatprep.subr.mxu0 0.0
  %343 = vmatpush1.msra.mxu0 0.0
  %344 = vmatprep.subr.mxu0 0.0
  %345 = vmatpush1.msra.mxu0 0.0
  %346 = vmatprep.subr.mxu0 0.0
  %347 = vmatpush1.msra.mxu0 0.0
  %348 = vmatprep.subr.mxu0 0.0
  %349 = vmatpush1.msra.mxu0 0.0
  %350 = vmatprep.subr.mxu0 0.0
  %351 = vmatpush1.msra.mxu0 0.0
  %352 = vmatprep.mubr.f32.mxu0 0.0
  %353 = vmatmul.mubr.f32.gmra.mrb[0].mxu0 %v286
  %v354 = vpop.f32.mrb[0].mxu0
  %v355 = vadd.f32 0.0, %v354
  %v356 = vpop.f32.mrb[0].mxu0
  %357 = vdwg.mxu0
  %v358 = vmax.f32 %v278, 0.0
  %v360 = vsel %vm99, %v358, 0
  %362 = vmatprep.subr.mxu0 0.0
  %363 = vmatpush1.msra.mxu0 %v82
  %364 = vmatprep.subr.mxu0 0.0
  %365 = vmatpush1.msra.mxu0 %v83
  %366 = vmatprep.subr.mxu0 0.0
  %367 = vmatpush1.msra.mxu0 0.0
  %368 = vmatprep.subr.mxu0 0.0
  %369 = vmatpush1.msra.mxu0 0.0
  %370 = vmatprep.subr.mxu0 0.0
  %371 = vmatpush1.msra.mxu0 0.0
  %372 = vmatprep.subr.mxu0 0.0
  %373 = vmatpush1.msra.mxu0 0.0
  %374 = vmatprep.subr.mxu0 0.0
  %375 = vmatpush1.msra.mxu0 0.0
  %376 = vmatprep.subr.mxu0 0.0
  %377 = vmatpush1.msra.mxu0 0.0
  %378 = vmatprep.subr.mxu0 0.0
  %379 = vmatpush1.msra.mxu0 0.0
  %380 = vmatprep.subr.mxu0 0.0
  %381 = vmatpush1.msra.mxu0 0.0
  %382 = vmatprep.subr.mxu0 0.0
  %383 = vmatpush1.msra.mxu0 0.0
  %384 = vmatprep.subr.mxu0 0.0
  %385 = vmatpush1.msra.mxu0 0.0
  %386 = vmatprep.subr.mxu0 0.0
  %387 = vmatpush1.msra.mxu0 0.0
  %388 = vmatprep.subr.mxu0 0.0
  %389 = vmatpush1.msra.mxu0 0.0
  %390 = vmatprep.subr.mxu0 0.0
  %391 = vmatpush1.msra.mxu0 0.0
  %392 = vmatprep.subr.mxu0 0.0
  %393 = vmatpush1.msra.mxu0 0.0
  %394 = vmatprep.subr.mxu0 0.0
  %395 = vmatpush1.msra.mxu0 0.0
  %396 = vmatprep.subr.mxu0 0.0
  %397 = vmatpush1.msra.mxu0 0.0
  %398 = vmatprep.subr.mxu0 0.0
  %399 = vmatpush1.msra.mxu0 0.0
  %400 = vmatprep.subr.mxu0 0.0
  %401 = vmatpush1.msra.mxu0 0.0
  %402 = vmatprep.subr.mxu0 0.0
  %403 = vmatpush1.msra.mxu0 0.0
  %404 = vmatprep.subr.mxu0 0.0
  %405 = vmatpush1.msra.mxu0 0.0
  %406 = vmatprep.subr.mxu0 0.0
  %407 = vmatpush1.msra.mxu0 0.0
  %408 = vmatprep.subr.mxu0 0.0
  %409 = vmatpush1.msra.mxu0 0.0
  %410 = vmatprep.subr.mxu0 0.0
  %411 = vmatpush1.msra.mxu0 0.0
  %412 = vmatprep.subr.mxu0 0.0
  %413 = vmatpush1.msra.mxu0 0.0
  %414 = vmatprep.subr.mxu0 0.0
  %415 = vmatpush1.msra.mxu0 0.0
  %416 = vmatprep.subr.mxu0 0.0
  %417 = vmatpush1.msra.mxu0 0.0
  %418 = vmatprep.subr.mxu0 0.0
  %419 = vmatpush1.msra.mxu0 0.0
  %420 = vmatprep.subr.mxu0 0.0
  %421 = vmatpush1.msra.mxu0 0.0
  %422 = vmatprep.subr.mxu0 0.0
  %423 = vmatpush1.msra.mxu0 0.0
  %424 = vmatprep.subr.mxu0 0.0
  %425 = vmatpush1.msra.mxu0 0.0
  %426 = vmatprep.mubr.f32.mxu0 0.0
  %427 = vmatmul.mubr.f32.gmra.mrb[0].mxu0 %v360
  %v428 = vpop.f32.mrb[0].mxu0
  %v429 = vadd.f32 0.0, %v428
  %v430 = vpop.f32.mrb[0].mxu0
  %431 = vdwg.mxu0
  %v432 = vmul.f32 %v429, %v89
  %v433 = vsub.f32 0.0, %v278
  %v434 = vmax.f32 %v433, 0.0
  %v436 = vsel %vm99, %v434, 0
  %438 = vmatprep.subr.mxu0 0.0
  %439 = vmatpush1.msra.mxu0 %v82
  %440 = vmatprep.subr.mxu0 0.0
  %441 = vmatpush1.msra.mxu0 %v83
  %442 = vmatprep.subr.mxu0 0.0
  %443 = vmatpush1.msra.mxu0 0.0
  %444 = vmatprep.subr.mxu0 0.0
  %445 = vmatpush1.msra.mxu0 0.0
  %446 = vmatprep.subr.mxu0 0.0
  %447 = vmatpush1.msra.mxu0 0.0
  %448 = vmatprep.subr.mxu0 0.0
  %449 = vmatpush1.msra.mxu0 0.0
  %450 = vmatprep.subr.mxu0 0.0
  %451 = vmatpush1.msra.mxu0 0.0
  %452 = vmatprep.subr.mxu0 0.0
  %453 = vmatpush1.msra.mxu0 0.0
  %454 = vmatprep.subr.mxu0 0.0
  %455 = vmatpush1.msra.mxu0 0.0
  %456 = vmatprep.subr.mxu0 0.0
  %457 = vmatpush1.msra.mxu0 0.0
  %458 = vmatprep.subr.mxu0 0.0
  %459 = vmatpush1.msra.mxu0 0.0
  %460 = vmatprep.subr.mxu0 0.0
  %461 = vmatpush1.msra.mxu0 0.0
  %462 = vmatprep.subr.mxu0 0.0
  %463 = vmatpush1.msra.mxu0 0.0
  %464 = vmatprep.subr.mxu0 0.0
  %465 = vmatpush1.msra.mxu0 0.0
  %466 = vmatprep.subr.mxu0 0.0
  %467 = vmatpush1.msra.mxu0 0.0
  %468 = vmatprep.subr.mxu0 0.0
  %469 = vmatpush1.msra.mxu0 0.0
  %470 = vmatprep.subr.mxu0 0.0
  %471 = vmatpush1.msra.mxu0 0.0
  %472 = vmatprep.subr.mxu0 0.0
  %473 = vmatpush1.msra.mxu0 0.0
  %474 = vmatprep.subr.mxu0 0.0
  %475 = vmatpush1.msra.mxu0 0.0
  %476 = vmatprep.subr.mxu0 0.0
  %477 = vmatpush1.msra.mxu0 0.0
  %478 = vmatprep.subr.mxu0 0.0
  %479 = vmatpush1.msra.mxu0 0.0
  %480 = vmatprep.subr.mxu0 0.0
  %481 = vmatpush1.msra.mxu0 0.0
  %482 = vmatprep.subr.mxu0 0.0
  %483 = vmatpush1.msra.mxu0 0.0
  %484 = vmatprep.subr.mxu0 0.0
  %485 = vmatpush1.msra.mxu0 0.0
  %486 = vmatprep.subr.mxu0 0.0
  %487 = vmatpush1.msra.mxu0 0.0
  %488 = vmatprep.subr.mxu0 0.0
  %489 = vmatpush1.msra.mxu0 0.0
  %490 = vmatprep.subr.mxu0 0.0
  %491 = vmatpush1.msra.mxu0 0.0
  %492 = vmatprep.subr.mxu0 0.0
  %493 = vmatpush1.msra.mxu0 0.0
  %494 = vmatprep.subr.mxu0 0.0
  %495 = vmatpush1.msra.mxu0 0.0
  %496 = vmatprep.subr.mxu0 0.0
  %497 = vmatpush1.msra.mxu0 0.0
  %498 = vmatprep.subr.mxu0 0.0
  %499 = vmatpush1.msra.mxu0 0.0
  %500 = vmatprep.subr.mxu0 0.0
  %501 = vmatpush1.msra.mxu0 0.0
  %502 = vmatprep.mubr.f32.mxu0 0.0
  %503 = vmatmul.mubr.f32.gmra.mrb[0].mxu0 %v436
  %v504 = vpop.f32.mrb[0].mxu0
  %v505 = vadd.f32 0.0, %v504
  %v506 = vpop.f32.mrb[0].mxu0
  %507 = vdwg.mxu0
  %v508 = vmul.f32 %v505, %v89
  %v509 = vmul.f32 %v432, 100.0
  %v510 = vadd.f32 %v432, %v508
  %v511 = vadd.f32 %v510, 1e-08
  %v512 = vrcp.pop %v511
  %v513 = vmul.f32 %v509, %v512
  %515 = vrot.lane.b32.xlu0 %v66, 5
  %v516 = vpop.permute.xlu0 %515
  %v518 = vsub.f32 %v66, %v516
  %v519 = vadd.f32 %v66, 1e-08
  %521 = vrot.lane.b32.xlu0 %v519, 5
  %v522 = vpop.permute.xlu0 %521
  %v524 = vrcp.pop %v522
  %v525 = vmul.f32 %v518, %v524
  %vm526 = vcmp.eq.s32.totalorder %v68, %v71
  %v527 = vadd.s32 %v71, 4
  %vm528 = vcmp.eq.s32.totalorder %v68, %v527
  %vm529 = vmor %vm526, %vm528
  %v530 = vsel %vm529, 1, 0
  %v531 = vcvt.s32.f32 %v530
  %v532 = vld [vmem:[%s4] sm:$0xf]
  %vm533 = vcmask 31744
  %v535 = vsel %vm533, %v531, 0
  %vm537 = vcmask 1043456
  %v539 = vsel %vm537, %v532, 0
  %541 = vmatprep.subr.mxu0 0.0
  %542 = vmatpush1.msra.mxu0 %v539
  %543 = vmatprep.subr.mxu0 0.0
  %544 = vmatpush1.msra.mxu0 0.0
  %545 = vmatprep.subr.mxu0 0.0
  %546 = vmatpush1.msra.mxu0 0.0
  %547 = vmatprep.subr.mxu0 0.0
  %548 = vmatpush1.msra.mxu0 0.0
  %549 = vmatprep.subr.mxu0 0.0
  %550 = vmatpush1.msra.mxu0 0.0
  %551 = vmatprep.subr.mxu0 0.0
  %552 = vmatpush1.msra.mxu0 0.0
  %553 = vmatprep.subr.mxu0 0.0
  %554 = vmatpush1.msra.mxu0 0.0
  %555 = vmatprep.subr.mxu0 0.0
  %556 = vmatpush1.msra.mxu0 0.0
  %557 = vmatprep.subr.mxu0 0.0
  %558 = vmatpush1.msra.mxu0 0.0
  %559 = vmatprep.subr.mxu0 0.0
  %560 = vmatpush1.msra.mxu0 0.0
  %561 = vmatprep.subr.mxu0 0.0
  %562 = vmatpush1.msra.mxu0 0.0
  %563 = vmatprep.subr.mxu0 0.0
  %564 = vmatpush1.msra.mxu0 0.0
  %565 = vmatprep.subr.mxu0 0.0
  %566 = vmatpush1.msra.mxu0 0.0
  %567 = vmatprep.subr.mxu0 0.0
  %568 = vmatpush1.msra.mxu0 0.0
  %569 = vmatprep.subr.mxu0 0.0
  %570 = vmatpush1.msra.mxu0 0.0
  %571 = vmatprep.subr.mxu0 0.0
  %572 = vmatpush1.msra.mxu0 0.0
  %573 = vmatprep.subr.mxu0 0.0
  %574 = vmatpush1.msra.mxu0 0.0
  %575 = vmatprep.subr.mxu0 0.0
  %576 = vmatpush1.msra.mxu0 0.0
  %577 = vmatprep.subr.mxu0 0.0
  %578 = vmatpush1.msra.mxu0 0.0
  %579 = vmatprep.subr.mxu0 0.0
  %580 = vmatpush1.msra.mxu0 0.0
  %581 = vmatprep.subr.mxu0 0.0
  %582 = vmatpush1.msra.mxu0 0.0
  %583 = vmatprep.subr.mxu0 0.0
  %584 = vmatpush1.msra.mxu0 0.0
  %585 = vmatprep.subr.mxu0 0.0
  %586 = vmatpush1.msra.mxu0 0.0
  %587 = vmatprep.subr.mxu0 0.0
  %588 = vmatpush1.msra.mxu0 0.0
  %589 = vmatprep.subr.mxu0 0.0
  %590 = vmatpush1.msra.mxu0 0.0
  %591 = vmatprep.subr.mxu0 0.0
  %592 = vmatpush1.msra.mxu0 0.0
  %593 = vmatprep.subr.mxu0 0.0
  %594 = vmatpush1.msra.mxu0 0.0
  %595 = vmatprep.subr.mxu0 0.0
  %596 = vmatpush1.msra.mxu0 0.0
  %597 = vmatprep.subr.mxu0 0.0
  %598 = vmatpush1.msra.mxu0 0.0
  %599 = vmatprep.subr.mxu0 0.0
  %600 = vmatpush1.msra.mxu0 0.0
  %601 = vmatprep.subr.mxu0 0.0
  %602 = vmatpush1.msra.mxu0 0.0
  %603 = vmatprep.subr.mxu0 0.0
  %604 = vmatpush1.msra.mxu0 0.0
  %605 = vmatprep.mubr.f32.mxu0 0.0
  %606 = vmatmul.mubr.f32.gmra.mrb[0].mxu0 %v535
  %v607 = vpop.f32.mrb[0].mxu0
  %v608 = vadd.f32 0.0, %v607
  %v609 = vpop.f32.mrb[0].mxu0
  %610 = vdwg.mxu0
  %v611 = vld [vmem:[%s17] sm:$0xf]
  %v613 = vsel %vm537, %v611, 0
  %615 = vmatprep.subr.mxu0 0.0
  %616 = vmatpush1.msra.mxu0 %v613
  %617 = vmatprep.subr.mxu0 0.0
  %618 = vmatpush1.msra.mxu0 0.0
  %619 = vmatprep.subr.mxu0 0.0
  %620 = vmatpush1.msra.mxu0 0.0
  %621 = vmatprep.subr.mxu0 0.0
  %622 = vmatpush1.msra.mxu0 0.0
  %623 = vmatprep.subr.mxu0 0.0
  %624 = vmatpush1.msra.mxu0 0.0
  %625 = vmatprep.subr.mxu0 0.0
  %626 = vmatpush1.msra.mxu0 0.0
  %627 = vmatprep.subr.mxu0 0.0
  %628 = vmatpush1.msra.mxu0 0.0
  %629 = vmatprep.subr.mxu0 0.0
  %630 = vmatpush1.msra.mxu0 0.0
  %631 = vmatprep.subr.mxu0 0.0
  %632 = vmatpush1.msra.mxu0 0.0
  %633 = vmatprep.subr.mxu0 0.0
  %634 = vmatpush1.msra.mxu0 0.0
  %635 = vmatprep.subr.mxu0 0.0
  %636 = vmatpush1.msra.mxu0 0.0
  %637 = vmatprep.subr.mxu0 0.0
  %638 = vmatpush1.msra.mxu0 0.0
  %639 = vmatprep.subr.mxu0 0.0
  %640 = vmatpush1.msra.mxu0 0.0
  %641 = vmatprep.subr.mxu0 0.0
  %642 = vmatpush1.msra.mxu0 0.0
  %643 = vmatprep.subr.mxu0 0.0
  %644 = vmatpush1.msra.mxu0 0.0
  %645 = vmatprep.subr.mxu0 0.0
  %646 = vmatpush1.msra.mxu0 0.0
  %647 = vmatprep.subr.mxu0 0.0
  %648 = vmatpush1.msra.mxu0 0.0
  %649 = vmatprep.subr.mxu0 0.0
  %650 = vmatpush1.msra.mxu0 0.0
  %651 = vmatprep.subr.mxu0 0.0
  %652 = vmatpush1.msra.mxu0 0.0
  %653 = vmatprep.subr.mxu0 0.0
  %654 = vmatpush1.msra.mxu0 0.0
  %655 = vmatprep.subr.mxu0 0.0
  %656 = vmatpush1.msra.mxu0 0.0
  %657 = vmatprep.subr.mxu0 0.0
  %658 = vmatpush1.msra.mxu0 0.0
  %659 = vmatprep.subr.mxu0 0.0
  %660 = vmatpush1.msra.mxu0 0.0
  %661 = vmatprep.subr.mxu0 0.0
  %662 = vmatpush1.msra.mxu0 0.0
  %663 = vmatprep.subr.mxu0 0.0
  %664 = vmatpush1.msra.mxu0 0.0
  %665 = vmatprep.subr.mxu0 0.0
  %666 = vmatpush1.msra.mxu0 0.0
  %667 = vmatprep.subr.mxu0 0.0
  %668 = vmatpush1.msra.mxu0 0.0
  %669 = vmatprep.subr.mxu0 0.0
  %670 = vmatpush1.msra.mxu0 0.0
  %671 = vmatprep.subr.mxu0 0.0
  %672 = vmatpush1.msra.mxu0 0.0
  %673 = vmatprep.subr.mxu0 0.0
  %674 = vmatpush1.msra.mxu0 0.0
  %675 = vmatprep.subr.mxu0 0.0
  %676 = vmatpush1.msra.mxu0 0.0
  %677 = vmatprep.subr.mxu0 0.0
  %678 = vmatpush1.msra.mxu0 0.0
  %679 = vmatprep.mubr.f32.mxu0 0.0
  %680 = vmatmul.mubr.f32.gmra.mrb[0].mxu0 %v535
  %v681 = vpop.f32.mrb[0].mxu0
  %v682 = vadd.f32 0.0, %v681
  %v683 = vpop.f32.mrb[0].mxu0
  %684 = vdwg.mxu0
  %686 = vrot.lane.b32.xlu0 %v271, 7
  %v687 = vpop.permute.xlu0 %686
  %690 = vrot.lane.b32.xlu0 %v608, 14
  %v691 = vpop.permute.xlu0 %690
  %vm693 = vcmask 56320
  %v694 = vsel %vm693, %v261, %v687
  %vm695 = vcmask 113664
  %v696 = vsel %vm695, %v694, %v691
  %698 = vrot.lane.b32.xlu0 %v525, 119
  %v699 = vpop.permute.xlu0 %698
  %702 = vrot.lane.b32.xlu0 %v513, 7
  %v703 = vpop.permute.xlu0 %702
  %706 = vrot.lane.b32.xlu0 %v355, 14
  %v707 = vpop.permute.xlu0 %706
  %710 = vrot.lane.b32.xlu0 %v696, 21
  %v711 = vpop.permute.xlu0 %710
  %v713 = vsel %vm693, %v699, %v703
  %v714 = vsel %vm695, %v713, %v707
  %vm715 = vcmask 171008
  %v716 = vsel %vm715, %v714, %v711
  %v717 = vld [vmem:[%s5] sm:$0xff]
  %v718 = vld [vmem:[%s5 + $0x8] sm:$0xff]
  %v719 = vld [vmem:[%s5 + $0x10] sm:$0xff]
  %v720 = vld [vmem:[%s5 + $0x18] sm:$0x3f]
  %v721 = vld [vmem:[%s6] sm:$0x1]
  %v722 = vld [vmem:[%s7] sm:$0xff]
  %v723 = vld [vmem:[%s7 + $0x8] sm:$0xff]
  %v724 = vld [vmem:[%s7 + $0x10] sm:$0xff]
  %v725 = vld [vmem:[%s7 + $0x18] sm:$0xff]
  %v726 = vld [vmem:[%s8] sm:$0x1]
  %v727 = vld [vmem:[%s9] sm:$0xff]
  %v728 = vld [vmem:[%s9 + $0x8] sm:$0xff]
  %v729 = vld [vmem:[%s9 + $0x10] sm:$0xff]
  %v730 = vld [vmem:[%s9 + $0x18] sm:$0xff]
  %v731 = vld [vmem:[%s10] sm:$0x1]
  %v733 = vlaneseq
  %v734 = vshrl.u32 %v733, 7
  %v735 = vsub.s32 0, %v734
  %v736 = vrot.slane %v721, %v735
  %vm738 = vcmask 244736
  %v739 = vsel %vm738, %v696, 0
  %vm741 = vcmask 1045504
  %v743 = vsel %vm741, %v720, 0
  %745 = vmatprep.subr.mxu0 0.0
  %746 = vmatpush1.msra.mxu0 %v717
  %747 = vmatprep.subr.mxu0 0.0
  %748 = vmatpush1.msra.mxu0 %v718
  %749 = vmatprep.subr.mxu0 0.0
  %750 = vmatpush1.msra.mxu0 %v719
  %751 = vmatprep.subr.mxu0 0.0
  %752 = vmatpush1.msra.mxu0 %v743
  %753 = vmatprep.subr.mxu0 0.0
  %754 = vmatpush1.msra.mxu0 0.0
  %755 = vmatprep.subr.mxu0 0.0
  %756 = vmatpush1.msra.mxu0 0.0
  %757 = vmatprep.subr.mxu0 0.0
  %758 = vmatpush1.msra.mxu0 0.0
  %759 = vmatprep.subr.mxu0 0.0
  %760 = vmatpush1.msra.mxu0 0.0
  %761 = vmatprep.subr.mxu0 0.0
  %762 = vmatpush1.msra.mxu0 0.0
  %763 = vmatprep.subr.mxu0 0.0
  %764 = vmatpush1.msra.mxu0 0.0
  %765 = vmatprep.subr.mxu0 0.0
  %766 = vmatpush1.msra.mxu0 0.0
  %767 = vmatprep.subr.mxu0 0.0
  %768 = vmatpush1.msra.mxu0 0.0
  %769 = vmatprep.subr.mxu0 0.0
  %770 = vmatpush1.msra.mxu0 0.0
  %771 = vmatprep.subr.mxu0 0.0
  %772 = vmatpush1.msra.mxu0 0.0
  %773 = vmatprep.subr.mxu0 0.0
  %774 = vmatpush1.msra.mxu0 0.0
  %775 = vmatprep.subr.mxu0 0.0
  %776 = vmatpush1.msra.mxu0 0.0
  %777 = vmatprep.subr.mxu0 0.0
  %778 = vmatpush1.msra.mxu0 0.0
  %779 = vmatprep.subr.mxu0 0.0
  %780 = vmatpush1.msra.mxu0 0.0
  %781 = vmatprep.subr.mxu0 0.0
  %782 = vmatpush1.msra.mxu0 0.0
  %783 = vmatprep.subr.mxu0 0.0
  %784 = vmatpush1.msra.mxu0 0.0
  %785 = vmatprep.subr.mxu0 0.0
  %786 = vmatpush1.msra.mxu0 0.0
  %787 = vmatprep.subr.mxu0 0.0
  %788 = vmatpush1.msra.mxu0 0.0
  %789 = vmatprep.subr.mxu0 0.0
  %790 = vmatpush1.msra.mxu0 0.0
  %791 = vmatprep.subr.mxu0 0.0
  %792 = vmatpush1.msra.mxu0 0.0
  %793 = vmatprep.subr.mxu0 0.0
  %794 = vmatpush1.msra.mxu0 0.0
  %795 = vmatprep.subr.mxu0 0.0
  %796 = vmatpush1.msra.mxu0 0.0
  %797 = vmatprep.subr.mxu0 0.0
  %798 = vmatpush1.msra.mxu0 0.0
  %799 = vmatprep.subr.mxu0 0.0
  %800 = vmatpush1.msra.mxu0 0.0
  %801 = vmatprep.subr.mxu0 0.0
  %802 = vmatpush1.msra.mxu0 0.0
  %803 = vmatprep.subr.mxu0 0.0
  %804 = vmatpush1.msra.mxu0 0.0
  %805 = vmatprep.subr.mxu0 0.0
  %806 = vmatpush1.msra.mxu0 0.0
  %807 = vmatprep.subr.mxu0 0.0
  %808 = vmatpush1.msra.mxu0 0.0
  %809 = vmatprep.mubr.f32.mxu0 0.0
  %810 = vmatmul.mubr.f32.gmra.mrb[0].mxu0 %v739
  %v811 = vpop.f32.mrb[0].mxu0
  %v812 = vadd.f32 %v736, %v811
  %v813 = vpop.f32.mrb[0].mxu0
  %814 = vdwg.mxu0
  %v815 = vmax.f32 %v812, 0.0
  %v817 = vlaneseq
  %v818 = vshrl.u32 %v817, 7
  %v819 = vsub.s32 0, %v818
  %v820 = vrot.slane %v726, %v819
  %vm822 = vcmask 261120
  %v824 = vsel %vm822, %v815, 0
  %826 = vmatprep.subr.mxu0 0.0
  %827 = vmatpush1.msra.mxu0 %v722
  %828 = vmatprep.subr.mxu0 0.0
  %829 = vmatpush1.msra.mxu0 %v723
  %830 = vmatprep.subr.mxu0 0.0
  %831 = vmatpush1.msra.mxu0 %v724
  %832 = vmatprep.subr.mxu0 0.0
  %833 = vmatpush1.msra.mxu0 %v725
  %834 = vmatprep.subr.mxu0 0.0
  %835 = vmatpush1.msra.mxu0 0.0
  %836 = vmatprep.subr.mxu0 0.0
  %837 = vmatpush1.msra.mxu0 0.0
  %838 = vmatprep.subr.mxu0 0.0
  %839 = vmatpush1.msra.mxu0 0.0
  %840 = vmatprep.subr.mxu0 0.0
  %841 = vmatpush1.msra.mxu0 0.0
  %842 = vmatprep.subr.mxu0 0.0
  %843 = vmatpush1.msra.mxu0 0.0
  %844 = vmatprep.subr.mxu0 0.0
  %845 = vmatpush1.msra.mxu0 0.0
  %846 = vmatprep.subr.mxu0 0.0
  %847 = vmatpush1.msra.mxu0 0.0
  %848 = vmatprep.subr.mxu0 0.0
  %849 = vmatpush1.msra.mxu0 0.0
  %850 = vmatprep.subr.mxu0 0.0
  %851 = vmatpush1.msra.mxu0 0.0
  %852 = vmatprep.subr.mxu0 0.0
  %853 = vmatpush1.msra.mxu0 0.0
  %854 = vmatprep.subr.mxu0 0.0
  %855 = vmatpush1.msra.mxu0 0.0
  %856 = vmatprep.subr.mxu0 0.0
  %857 = vmatpush1.msra.mxu0 0.0
  %858 = vmatprep.subr.mxu0 0.0
  %859 = vmatpush1.msra.mxu0 0.0
  %860 = vmatprep.subr.mxu0 0.0
  %861 = vmatpush1.msra.mxu0 0.0
  %862 = vmatprep.subr.mxu0 0.0
  %863 = vmatpush1.msra.mxu0 0.0
  %864 = vmatprep.subr.mxu0 0.0
  %865 = vmatpush1.msra.mxu0 0.0
  %866 = vmatprep.subr.mxu0 0.0
  %867 = vmatpush1.msra.mxu0 0.0
  %868 = vmatprep.subr.mxu0 0.0
  %869 = vmatpush1.msra.mxu0 0.0
  %870 = vmatprep.subr.mxu0 0.0
  %871 = vmatpush1.msra.mxu0 0.0
  %872 = vmatprep.subr.mxu0 0.0
  %873 = vmatpush1.msra.mxu0 0.0
  %874 = vmatprep.subr.mxu0 0.0
  %875 = vmatpush1.msra.mxu0 0.0
  %876 = vmatprep.subr.mxu0 0.0
  %877 = vmatpush1.msra.mxu0 0.0
  %878 = vmatprep.subr.mxu0 0.0
  %879 = vmatpush1.msra.mxu0 0.0
  %880 = vmatprep.subr.mxu0 0.0
  %881 = vmatpush1.msra.mxu0 0.0
  %882 = vmatprep.subr.mxu0 0.0
  %883 = vmatpush1.msra.mxu0 0.0
  %884 = vmatprep.subr.mxu0 0.0
  %885 = vmatpush1.msra.mxu0 0.0
  %886 = vmatprep.subr.mxu0 0.0
  %887 = vmatpush1.msra.mxu0 0.0
  %888 = vmatprep.subr.mxu0 0.0
  %889 = vmatpush1.msra.mxu0 0.0
  %890 = vmatprep.mubr.f32.mxu0 0.0
  %891 = vmatmul.mubr.f32.gmra.mrb[0].mxu0 %v824
  %v892 = vpop.f32.mrb[0].mxu0
  %v893 = vadd.f32 %v820, %v892
  %v894 = vpop.f32.mrb[0].mxu0
  %895 = vdwg.mxu0
  %v896 = vmax.f32 %v893, 0.0
  %v898 = vlaneseq
  %v899 = vshrl.u32 %v898, 7
  %v900 = vsub.s32 0, %v899
  %v901 = vrot.slane %v731, %v900
  %v904 = vsel %vm822, %v896, 0
  %906 = vmatprep.subr.mxu0 0.0
  %907 = vmatpush1.msra.mxu0 %v727
  %908 = vmatprep.subr.mxu0 0.0
  %909 = vmatpush1.msra.mxu0 %v728
  %910 = vmatprep.subr.mxu0 0.0
  %911 = vmatpush1.msra.mxu0 %v729
  %912 = vmatprep.subr.mxu0 0.0
  %913 = vmatpush1.msra.mxu0 %v730
  %914 = vmatprep.subr.mxu0 0.0
  %915 = vmatpush1.msra.mxu0 0.0
  %916 = vmatprep.subr.mxu0 0.0
  %917 = vmatpush1.msra.mxu0 0.0
  %918 = vmatprep.subr.mxu0 0.0
  %919 = vmatpush1.msra.mxu0 0.0
  %920 = vmatprep.subr.mxu0 0.0
  %921 = vmatpush1.msra.mxu0 0.0
  %922 = vmatprep.subr.mxu0 0.0
  %923 = vmatpush1.msra.mxu0 0.0
  %924 = vmatprep.subr.mxu0 0.0
  %925 = vmatpush1.msra.mxu0 0.0
  %926 = vmatprep.subr.mxu0 0.0
  %927 = vmatpush1.msra.mxu0 0.0
  %928 = vmatprep.subr.mxu0 0.0
  %929 = vmatpush1.msra.mxu0 0.0
  %930 = vmatprep.subr.mxu0 0.0
  %931 = vmatpush1.msra.mxu0 0.0
  %932 = vmatprep.subr.mxu0 0.0
  %933 = vmatpush1.msra.mxu0 0.0
  %934 = vmatprep.subr.mxu0 0.0
  %935 = vmatpush1.msra.mxu0 0.0
  %936 = vmatprep.subr.mxu0 0.0
  %937 = vmatpush1.msra.mxu0 0.0
  %938 = vmatprep.subr.mxu0 0.0
  %939 = vmatpush1.msra.mxu0 0.0
  %940 = vmatprep.subr.mxu0 0.0
  %941 = vmatpush1.msra.mxu0 0.0
  %942 = vmatprep.subr.mxu0 0.0
  %943 = vmatpush1.msra.mxu0 0.0
  %944 = vmatprep.subr.mxu0 0.0
  %945 = vmatpush1.msra.mxu0 0.0
  %946 = vmatprep.subr.mxu0 0.0
  %947 = vmatpush1.msra.mxu0 0.0
  %948 = vmatprep.subr.mxu0 0.0
  %949 = vmatpush1.msra.mxu0 0.0
  %950 = vmatprep.subr.mxu0 0.0
  %951 = vmatpush1.msra.mxu0 0.0
  %952 = vmatprep.subr.mxu0 0.0
  %953 = vmatpush1.msra.mxu0 0.0
  %954 = vmatprep.subr.mxu0 0.0
  %955 = vmatpush1.msra.mxu0 0.0
  %956 = vmatprep.subr.mxu0 0.0
  %957 = vmatpush1.msra.mxu0 0.0
  %958 = vmatprep.subr.mxu0 0.0
  %959 = vmatpush1.msra.mxu0 0.0
  %960 = vmatprep.subr.mxu0 0.0
  %961 = vmatpush1.msra.mxu0 0.0
  %962 = vmatprep.subr.mxu0 0.0
  %963 = vmatpush1.msra.mxu0 0.0
  %964 = vmatprep.subr.mxu0 0.0
  %965 = vmatpush1.msra.mxu0 0.0
  %966 = vmatprep.subr.mxu0 0.0
  %967 = vmatpush1.msra.mxu0 0.0
  %968 = vmatprep.subr.mxu0 0.0
  %969 = vmatpush1.msra.mxu0 0.0
  %970 = vmatprep.mubr.f32.mxu0 0.0
  %971 = vmatmul.mubr.f32.gmra.mrb[0].mxu0 %v904
  %v972 = vpop.f32.mrb[0].mxu0
  %v973 = vadd.f32 %v901, %v972
  %v974 = vpop.f32.mrb[0].mxu0
  %975 = vdwg.mxu0
  %v976 = vld [vmem:[%s11] sm:$0xff]
  %v977 = vld [vmem:[%s11 + $0x8] sm:$0xff]
  %v978 = vld [vmem:[%s11 + $0x10] sm:$0xff]
  %v979 = vld [vmem:[%s11 + $0x18] sm:$0xff]
  %v980 = vld [vmem:[%s11 + $0x20] sm:$0xff]
  %v981 = vld [vmem:[%s11 + $0x28] sm:$0xff]
  %v982 = vld [vmem:[%s11 + $0x30] sm:$0x7]
  %v983 = vld [vmem:[%s12] sm:$0x1]
  %v984 = vld [vmem:[%s13] sm:$0xff]
  %v985 = vld [vmem:[%s13 + $0x8] sm:$0xff]
  %v986 = vld [vmem:[%s13 + $0x10] sm:$0xff]
  %v987 = vld [vmem:[%s13 + $0x18] sm:$0xff]
  %v988 = vld [vmem:[%s14] sm:$0x1]
  %v989 = vld [vmem:[%s15] sm:$0xff]
  %v990 = vld [vmem:[%s15 + $0x8] sm:$0xff]
  %v991 = vld [vmem:[%s15 + $0x10] sm:$0xff]
  %v992 = vld [vmem:[%s15 + $0x18] sm:$0xff]
  %v993 = vld [vmem:[%s16] sm:$0x1]
  %v995 = vlaneseq
  %v996 = vshrl.u32 %v995, 7
  %v997 = vsub.s32 0, %v996
  %v998 = vrot.slane %v983, %v997
  %vm1000 = vcmask 416768
  %v1002 = vsel %vm1000, %v716, 0
  %vm1004 = vcmask 1042432
  %v1006 = vsel %vm1004, %v982, 0
  %1008 = vmatprep.subr.mxu0 0.0
  %1009 = vmatpush1.msra.mxu0 %v976
  %1010 = vmatprep.subr.mxu0 0.0
  %1011 = vmatpush1.msra.mxu0 %v977
  %1012 = vmatprep.subr.mxu0 0.0
  %1013 = vmatpush1.msra.mxu0 %v978
  %1014 = vmatprep.subr.mxu0 0.0
  %1015 = vmatpush1.msra.mxu0 %v979
  %1016 = vmatprep.subr.mxu0 0.0
  %1017 = vmatpush1.msra.mxu0 %v980
  %1018 = vmatprep.subr.mxu0 0.0
  %1019 = vmatpush1.msra.mxu0 %v981
  %1020 = vmatprep.subr.mxu0 0.0
  %1021 = vmatpush1.msra.mxu0 %v1006
  %1022 = vmatprep.subr.mxu0 0.0
  %1023 = vmatpush1.msra.mxu0 0.0
  %1024 = vmatprep.subr.mxu0 0.0
  %1025 = vmatpush1.msra.mxu0 0.0
  %1026 = vmatprep.subr.mxu0 0.0
  %1027 = vmatpush1.msra.mxu0 0.0
  %1028 = vmatprep.subr.mxu0 0.0
  %1029 = vmatpush1.msra.mxu0 0.0
  %1030 = vmatprep.subr.mxu0 0.0
  %1031 = vmatpush1.msra.mxu0 0.0
  %1032 = vmatprep.subr.mxu0 0.0
  %1033 = vmatpush1.msra.mxu0 0.0
  %1034 = vmatprep.subr.mxu0 0.0
  %1035 = vmatpush1.msra.mxu0 0.0
  %1036 = vmatprep.subr.mxu0 0.0
  %1037 = vmatpush1.msra.mxu0 0.0
  %1038 = vmatprep.subr.mxu0 0.0
  %1039 = vmatpush1.msra.mxu0 0.0
  %1040 = vmatprep.subr.mxu0 0.0
  %1041 = vmatpush1.msra.mxu0 0.0
  %1042 = vmatprep.subr.mxu0 0.0
  %1043 = vmatpush1.msra.mxu0 0.0
  %1044 = vmatprep.subr.mxu0 0.0
  %1045 = vmatpush1.msra.mxu0 0.0
  %1046 = vmatprep.subr.mxu0 0.0
  %1047 = vmatpush1.msra.mxu0 0.0
  %1048 = vmatprep.subr.mxu0 0.0
  %1049 = vmatpush1.msra.mxu0 0.0
  %1050 = vmatprep.subr.mxu0 0.0
  %1051 = vmatpush1.msra.mxu0 0.0
  %1052 = vmatprep.subr.mxu0 0.0
  %1053 = vmatpush1.msra.mxu0 0.0
  %1054 = vmatprep.subr.mxu0 0.0
  %1055 = vmatpush1.msra.mxu0 0.0
  %1056 = vmatprep.subr.mxu0 0.0
  %1057 = vmatpush1.msra.mxu0 0.0
  %1058 = vmatprep.subr.mxu0 0.0
  %1059 = vmatpush1.msra.mxu0 0.0
  %1060 = vmatprep.subr.mxu0 0.0
  %1061 = vmatpush1.msra.mxu0 0.0
  %1062 = vmatprep.subr.mxu0 0.0
  %1063 = vmatpush1.msra.mxu0 0.0
  %1064 = vmatprep.subr.mxu0 0.0
  %1065 = vmatpush1.msra.mxu0 0.0
  %1066 = vmatprep.subr.mxu0 0.0
  %1067 = vmatpush1.msra.mxu0 0.0
  %1068 = vmatprep.subr.mxu0 0.0
  %1069 = vmatpush1.msra.mxu0 0.0
  %1070 = vmatprep.subr.mxu0 0.0
  %1071 = vmatpush1.msra.mxu0 0.0
  %1072 = vmatprep.mubr.f32.mxu0 0.0
  %1073 = vmatmul.mubr.f32.gmra.mrb[0].mxu0 %v1002
  %v1074 = vpop.f32.mrb[0].mxu0
  %v1075 = vadd.f32 %v998, %v1074
  %v1076 = vpop.f32.mrb[0].mxu0
  %1077 = vdwg.mxu0
  %v1078 = vmax.f32 %v1075, 0.0
  %v1080 = vlaneseq
  %v1081 = vshrl.u32 %v1080, 7
  %v1082 = vsub.s32 0, %v1081
  %v1083 = vrot.slane %v988, %v1082
  %v1086 = vsel %vm822, %v1078, 0
  %1088 = vmatprep.subr.mxu0 0.0
  %1089 = vmatpush1.msra.mxu0 %v984
  %1090 = vmatprep.subr.mxu0 0.0
  %1091 = vmatpush1.msra.mxu0 %v985
  %1092 = vmatprep.subr.mxu0 0.0
  %1093 = vmatpush1.msra.mxu0 %v986
  %1094 = vmatprep.subr.mxu0 0.0
  %1095 = vmatpush1.msra.mxu0 %v987
  %1096 = vmatprep.subr.mxu0 0.0
  %1097 = vmatpush1.msra.mxu0 0.0
  %1098 = vmatprep.subr.mxu0 0.0
  %1099 = vmatpush1.msra.mxu0 0.0
  %1100 = vmatprep.subr.mxu0 0.0
  %1101 = vmatpush1.msra.mxu0 0.0
  %1102 = vmatprep.subr.mxu0 0.0
  %1103 = vmatpush1.msra.mxu0 0.0
  %1104 = vmatprep.subr.mxu0 0.0
  %1105 = vmatpush1.msra.mxu0 0.0
  %1106 = vmatprep.subr.mxu0 0.0
  %1107 = vmatpush1.msra.mxu0 0.0
  %1108 = vmatprep.subr.mxu0 0.0
  %1109 = vmatpush1.msra.mxu0 0.0
  %1110 = vmatprep.subr.mxu0 0.0
  %1111 = vmatpush1.msra.mxu0 0.0
  %1112 = vmatprep.subr.mxu0 0.0
  %1113 = vmatpush1.msra.mxu0 0.0
  %1114 = vmatprep.subr.mxu0 0.0
  %1115 = vmatpush1.msra.mxu0 0.0
  %1116 = vmatprep.subr.mxu0 0.0
  %1117 = vmatpush1.msra.mxu0 0.0
  %1118 = vmatprep.subr.mxu0 0.0
  %1119 = vmatpush1.msra.mxu0 0.0
  %1120 = vmatprep.subr.mxu0 0.0
  %1121 = vmatpush1.msra.mxu0 0.0
  %1122 = vmatprep.subr.mxu0 0.0
  %1123 = vmatpush1.msra.mxu0 0.0
  %1124 = vmatprep.subr.mxu0 0.0
  %1125 = vmatpush1.msra.mxu0 0.0
  %1126 = vmatprep.subr.mxu0 0.0
  %1127 = vmatpush1.msra.mxu0 0.0
  %1128 = vmatprep.subr.mxu0 0.0
  %1129 = vmatpush1.msra.mxu0 0.0
  %1130 = vmatprep.subr.mxu0 0.0
  %1131 = vmatpush1.msra.mxu0 0.0
  %1132 = vmatprep.subr.mxu0 0.0
  %1133 = vmatpush1.msra.mxu0 0.0
  %1134 = vmatprep.subr.mxu0 0.0
  %1135 = vmatpush1.msra.mxu0 0.0
  %1136 = vmatprep.subr.mxu0 0.0
  %1137 = vmatpush1.msra.mxu0 0.0
  %1138 = vmatprep.subr.mxu0 0.0
  %1139 = vmatpush1.msra.mxu0 0.0
  %1140 = vmatprep.subr.mxu0 0.0
  %1141 = vmatpush1.msra.mxu0 0.0
  %1142 = vmatprep.subr.mxu0 0.0
  %1143 = vmatpush1.msra.mxu0 0.0
  %1144 = vmatprep.subr.mxu0 0.0
  %1145 = vmatpush1.msra.mxu0 0.0
  %1146 = vmatprep.subr.mxu0 0.0
  %1147 = vmatpush1.msra.mxu0 0.0
  %1148 = vmatprep.subr.mxu0 0.0
  %1149 = vmatpush1.msra.mxu0 0.0
  %1150 = vmatprep.subr.mxu0 0.0
  %1151 = vmatpush1.msra.mxu0 0.0
  %1152 = vmatprep.mubr.f32.mxu0 0.0
  %1153 = vmatmul.mubr.f32.gmra.mrb[0].mxu0 %v1086
  %v1154 = vpop.f32.mrb[0].mxu0
  %v1155 = vadd.f32 %v1083, %v1154
  %v1156 = vpop.f32.mrb[0].mxu0
  %1157 = vdwg.mxu0
  %v1158 = vmax.f32 %v1155, 0.0
  %v1160 = vlaneseq
  %v1161 = vshrl.u32 %v1160, 7
  %v1162 = vsub.s32 0, %v1161
  %v1163 = vrot.slane %v993, %v1162
  %v1166 = vsel %vm822, %v1158, 0
  %1168 = vmatprep.subr.mxu0 0.0
  %1169 = vmatpush1.msra.mxu0 %v989
  %1170 = vmatprep.subr.mxu0 0.0
  %1171 = vmatpush1.msra.mxu0 %v990
  %1172 = vmatprep.subr.mxu0 0.0
  %1173 = vmatpush1.msra.mxu0 %v991
  %1174 = vmatprep.subr.mxu0 0.0
  %1175 = vmatpush1.msra.mxu0 %v992
  %1176 = vmatprep.subr.mxu0 0.0
  %1177 = vmatpush1.msra.mxu0 0.0
  %1178 = vmatprep.subr.mxu0 0.0
  %1179 = vmatpush1.msra.mxu0 0.0
  %1180 = vmatprep.subr.mxu0 0.0
  %1181 = vmatpush1.msra.mxu0 0.0
  %1182 = vmatprep.subr.mxu0 0.0
  %1183 = vmatpush1.msra.mxu0 0.0
  %1184 = vmatprep.subr.mxu0 0.0
  %1185 = vmatpush1.msra.mxu0 0.0
  %1186 = vmatprep.subr.mxu0 0.0
  %1187 = vmatpush1.msra.mxu0 0.0
  %1188 = vmatprep.subr.mxu0 0.0
  %1189 = vmatpush1.msra.mxu0 0.0
  %1190 = vmatprep.subr.mxu0 0.0
  %1191 = vmatpush1.msra.mxu0 0.0
  %1192 = vmatprep.subr.mxu0 0.0
  %1193 = vmatpush1.msra.mxu0 0.0
  %1194 = vmatprep.subr.mxu0 0.0
  %1195 = vmatpush1.msra.mxu0 0.0
  %1196 = vmatprep.subr.mxu0 0.0
  %1197 = vmatpush1.msra.mxu0 0.0
  %1198 = vmatprep.subr.mxu0 0.0
  %1199 = vmatpush1.msra.mxu0 0.0
  %1200 = vmatprep.subr.mxu0 0.0
  %1201 = vmatpush1.msra.mxu0 0.0
  %1202 = vmatprep.subr.mxu0 0.0
  %1203 = vmatpush1.msra.mxu0 0.0
  %1204 = vmatprep.subr.mxu0 0.0
  %1205 = vmatpush1.msra.mxu0 0.0
  %1206 = vmatprep.subr.mxu0 0.0
  %1207 = vmatpush1.msra.mxu0 0.0
  %1208 = vmatprep.subr.mxu0 0.0
  %1209 = vmatpush1.msra.mxu0 0.0
  %1210 = vmatprep.subr.mxu0 0.0
  %1211 = vmatpush1.msra.mxu0 0.0
  %1212 = vmatprep.subr.mxu0 0.0
  %1213 = vmatpush1.msra.mxu0 0.0
  %1214 = vmatprep.subr.mxu0 0.0
  %1215 = vmatpush1.msra.mxu0 0.0
  %1216 = vmatprep.subr.mxu0 0.0
  %1217 = vmatpush1.msra.mxu0 0.0
  %1218 = vmatprep.subr.mxu0 0.0
  %1219 = vmatpush1.msra.mxu0 0.0
  %1220 = vmatprep.subr.mxu0 0.0
  %1221 = vmatpush1.msra.mxu0 0.0
  %1222 = vmatprep.subr.mxu0 0.0
  %1223 = vmatpush1.msra.mxu0 0.0
  %1224 = vmatprep.subr.mxu0 0.0
  %1225 = vmatpush1.msra.mxu0 0.0
  %1226 = vmatprep.subr.mxu0 0.0
  %1227 = vmatpush1.msra.mxu0 0.0
  %1228 = vmatprep.subr.mxu0 0.0
  %1229 = vmatpush1.msra.mxu0 0.0
  %1230 = vmatprep.subr.mxu0 0.0
  %1231 = vmatpush1.msra.mxu0 0.0
  %1232 = vmatprep.mubr.f32.mxu0 0.0
  %1233 = vmatmul.mubr.f32.gmra.mrb[0].mxu0 %v1166
  %v1234 = vpop.f32.mrb[0].mxu0
  %v1235 = vadd.f32 %v1163, %v1234
  %v1236 = vpop.f32.mrb[0].mxu0
  %1237 = vdwg.mxu0
  %v1238 = vxor.u32 %v973, 2147483648
  %v1239 = vmul.f32 %v1238, 1.442695
  %v1240 = vpow.pop %v1239
  %v1241 = vadd.f32 %v1240, 1.0
  %v1242 = vrcp.pop %v1241
  %v1243 = vmul.f32 1.0, %v1242
  %v1244 = vadd.f32 %v1243, 1.0
  %1246 = vrot.lane.b32.xlu0 %v1244, 3
  %v1247 = vpop.permute.xlu0 %1246
  %1249 = vrot.lane.b32.xlu0 %v1244, 6
  %v1250 = vpop.permute.xlu0 %1249
  %1252 = vrot.lane.b32.xlu0 %v1244, 9
  %v1253 = vpop.permute.xlu0 %1252
  %1255 = vrot.lane.b32.xlu0 %v1244, 12
  %v1256 = vpop.permute.xlu0 %1255
  %1258 = vrot.lane.b32.xlu0 %v1244, 15
  %v1259 = vpop.permute.xlu0 %1258
  %1261 = vrot.lane.b32.xlu0 %v1244, 18
  %v1262 = vpop.permute.xlu0 %1261
  %1264 = vrot.lane.b32.xlu0 %v1244, 21
  %v1265 = vpop.permute.xlu0 %1264
  %vm1267 = vcmask 23552
  %v1268 = vsel %vm1267, %v1244, %v1247
  %vm1269 = vcmask 48128
  %v1270 = vsel %vm1269, %v1268, %v1250
  %vm1271 = vcmask 72704
  %v1272 = vsel %vm1271, %v1270, %v1253
  %vm1273 = vcmask 97280
  %v1274 = vsel %vm1273, %v1272, %v1256
  %vm1275 = vcmask 121856
  %v1276 = vsel %vm1275, %v1274, %v1259
  %vm1277 = vcmask 146432
  %v1278 = vsel %vm1277, %v1276, %v1262
  %v1279 = vsel %vm715, %v1278, %v1265
  %v1280 = vmul.f32 %v682, %v1279
  %1281 = vrot.lane.b32.xlu0 %v1244, 125
  %v1282 = vpop.permute.xlu0 %1281
  %v1284 = vsel %vm1267, %v1282, %v1244
  %v1285 = vsel %vm1269, %v1284, %v1247
  %v1286 = vsel %vm1271, %v1285, %v1250
  %v1287 = vsel %vm1273, %v1286, %v1253
  %v1288 = vsel %vm1275, %v1287, %v1256
  %v1289 = vsel %vm1277, %v1288, %v1259
  %v1290 = vsel %vm715, %v1289, %v1262
  %1292 = vrot.lane.b32.xlu0 %v1290, 24
  %v1293 = vpop.permute.xlu0 %1292
  %v1295 = vmul.f32 %v682, %v1293
  %1296 = vrot.lane.b32.xlu0 %v1244, 122
  %v1297 = vpop.permute.xlu0 %1296
  %v1299 = vsel %vm1267, %v1297, %v1282
  %v1300 = vsel %vm1269, %v1299, %v1244
  %v1301 = vsel %vm1271, %v1300, %v1247
  %v1302 = vsel %vm1273, %v1301, %v1250
  %v1303 = vsel %vm1275, %v1302, %v1253
  %v1304 = vsel %vm1277, %v1303, %v1256
  %v1305 = vsel %vm715, %v1304, %v1259
  %1307 = vrot.lane.b32.xlu0 %v1305, 48
  %v1308 = vpop.permute.xlu0 %1307
  %v1310 = vmul.f32 %v682, %v1308
  %1311 = vrot.lane.b32.xlu0 %v1244, 119
  %v1312 = vpop.permute.xlu0 %1311
  %v1314 = vsel %vm1267, %v1312, %v1297
  %v1315 = vsel %vm1269, %v1314, %v1282
  %v1316 = vsel %vm1271, %v1315, %v1244
  %v1317 = vsel %vm1273, %v1316, %v1247
  %v1318 = vsel %vm1275, %v1317, %v1250
  %v1319 = vsel %vm1277, %v1318, %v1253
  %v1320 = vsel %vm715, %v1319, %v1256
  %1322 = vrot.lane.b32.xlu0 %v1320, 72
  %v1323 = vpop.permute.xlu0 %1322
  %v1325 = vmul.f32 %v682, %v1323
  %1327 = vrot.lane.b32.xlu0 %v1295, 104
  %v1328 = vpop.permute.xlu0 %1327
  %v1330 = vmax.f32 %v1280, %v1328
  %1332 = vrot.lane.b32.xlu0 %v1325, 104
  %v1333 = vpop.permute.xlu0 %1332
  %v1335 = vmax.f32 %v1310, %v1333
  %1337 = vrot.lane.b32.xlu0 %v1335, 80
  %v1338 = vpop.permute.xlu0 %1337
  %v1340 = vmax.f32 %v1330, %v1338
  %v1341 = vsub.f32 %v1280, %v1340
  %v1342 = vmul.f32 %v1341, 1.442695
  %v1343 = vpow.pop %v1342
  %1345 = vrot.lane.b32.xlu0 %v1340, 24
  %v1346 = vpop.permute.xlu0 %1345
  %v1348 = vsub.f32 %v1295, %v1346
  %v1349 = vmul.f32 %v1348, 1.442695
  %v1350 = vpow.pop %v1349
  %1351 = vrot.lane.b32.xlu0 %v1340, 48
  %v1352 = vpop.permute.xlu0 %1351
  %v1354 = vsub.f32 %v1310, %v1352
  %v1355 = vmul.f32 %v1354, 1.442695
  %v1356 = vpow.pop %v1355
  %1357 = vrot.lane.b32.xlu0 %v1340, 72
  %v1358 = vpop.permute.xlu0 %1357
  %v1360 = vsub.f32 %v1325, %v1358
  %v1361 = vmul.f32 %v1360, 1.442695
  %v1362 = vpow.pop %v1361
  %1364 = vrot.lane.b32.xlu0 %v1350, 104
  %v1365 = vpop.permute.xlu0 %1364
  %v1367 = vadd.f32 %v1343, %v1365
  %1369 = vrot.lane.b32.xlu0 %v1356, 80
  %v1370 = vpop.permute.xlu0 %1369
  %v1372 = vadd.f32 %v1367, %v1370
  %1374 = vrot.lane.b32.xlu0 %v1362, 56
  %v1375 = vpop.permute.xlu0 %1374
  %v1377 = vadd.f32 %v1372, %v1375
  %v1378 = vrcp.pop %v1377
  %v1379 = vmul.f32 %v1343, %v104
  %1380 = vset.pattern.permute.xlu0 15
  %1381 = vperm.xlu0 %1380, %v63
  %v1382 = vpop.permute.xlu0 %1381
  %v1384 = vmul.f32 %v1350, %v1382
  %1386 = vrot.lane.b32.xlu0 %v1384, 104
  %v1387 = vpop.permute.xlu0 %1386
  %v1389 = vadd.f32 %v1379, %v1387
  %v1390 = vmul.f32 %v1356, %v107
  %1392 = vrot.lane.b32.xlu0 %v1390, 80
  %v1393 = vpop.permute.xlu0 %1392
  %v1395 = vadd.f32 %v1389, %v1393
  %v1396 = vmul.f32 %v1362, %v110
  %1398 = vrot.lane.b32.xlu0 %v1396, 56
  %v1399 = vpop.permute.xlu0 %1398
  %v1401 = vadd.f32 %v1395, %v1399
  %v1402 = vmul.f32 %v1401, %v1378
  %s1403 = sld [smem:[#allocation2]]
  %v1404 = vstv %s1403
  %v1405 = vxor.u32 %v1404, 2147483648
  %v1406 = vmul.f32 %v1405, 1.442695
  %v1407 = vpow.pop %v1406
  %v1408 = vadd.f32 %v1407, 1.0
  %v1409 = vrcp.pop %v1408
  %v1410 = vmul.f32 1.0, %v1409
  %v1411 = vtanh.pop %v1235
  %v1412 = vmul.f32 %v1411, %v1410
  %v1413 = vadd.f32 %v1402, %v1412
  %vm1414 = vcmask 195584
  %1415 = vst.msk [vmem:[%s19] sm:$0xff] %vm1414, %v1413
  // Predicated region
  $region78: #{common_metrics_forward.1} parent=0 // pred_check
    _
  $region79: #{common_metrics_forward.1} parent=0 // pred_check_branch
    %1417 = sbr.rel (0) target = $region81
  $region80: #{common_metrics_forward.1} parent=0 // pred_region
    _
  $region81: #{common_metrics_forward.1} parent=0 // pred_fallthru
    _
  // Predicated region
  $region82: #{common_metrics_forward.1} parent=0 // pred_check
    _
  $region83: #{common_metrics_forward.1} parent=0 // pred_check_branch
    %1419 = sbr.rel (0) target = $region85
  $region84: #{common_metrics_forward.1} parent=0 // pred_region
    _
  $region85: #{common_metrics_forward.1} parent=0 // pred_fallthru
    _

</llo_original>
